<compile_context>
chip_gen: v7x
topology: tpu7x:2x2x1
jax: 0.10.0
libtpu: 0.0.40
codegen_flags: <defaults>
</compile_context>

<pallas_src>
import math
import functools

import jax
import jax.numpy as jnp
from jax.experimental import pallas as pl
from jax.experimental import pallas as _pl_unused  # noqa: F401
from jax.experimental.pallas import tpu as pltpu  # noqa: F401  (imported for completeness)


# ---------------------------------------------------------------------------
# Fused Pallas kernel (whole forward pass, single invocation, all in VMEM)
# ---------------------------------------------------------------------------

def _fused_gcn_kernel(x_ref, w1_ref, att1_ref, bn1s_ref, bn1b_ref,
                      att2_ref, w2a_ref, w2b_ref,
                      bnAs_ref, bnAb_ref, bnBs_ref, bnBb_ref,
                      w7_ref, att7_ref, b7_ref,
                      o_ref, *, c_coeffs):
    f32 = jnp.float32
    mxu_dt = w1_ref.dtype          # bf16 (fast path) or f32 (exact path)

    def mm(a, b):
        # MXU matmul: operands in mxu_dt, accumulate in f32.
        return jnp.dot(a.astype(mxu_dt), b.astype(mxu_dt),
                       preferred_element_type=f32)

    x = x_ref[...]                                               # (N, B*Fi_p) f32

    # gc1 -> bn1 -> tanh (dropout = identity at inference; bias folded into shift)
    s = mm(x, w1_ref[...])                                       # (N, B*Fh_p)
    y = mm(att1_ref[...], s)
    y = jnp.tanh(y * bn1s_ref[...] + bn1b_ref[...])              # f32 epilogue
    h0 = y

    # Residual GC blocks; num_stage is static -> unrolled Python loop.
    for i in range(len(c_coeffs)):
        att2 = att2_ref[i]                                       # (N, N)
        w2a = w2a_ref[i]                                         # theta*blockdiag(W[:F])
        w2b = w2b_ref[i]                                         # theta*blockdiag(W[F:])
        c = c_coeffs[i]                                          # (1-theta)*alpha
        # h0-dependent part is identical for both gc2 applications in the block.
        h0w = mm(h0, w2b) + c * h0

        hi = mm(att2, y)
        z = mm(hi, w2a) + c * hi + h0w
        z = jnp.tanh(z * bnAs_ref[i] + bnAb_ref[i])

        hi = mm(att2, z)
        z = mm(hi, w2a) + c * hi + h0w
        z = jnp.tanh(z * bnBs_ref[i] + bnBb_ref[i])

        y = z + y                                                # block residual

    # gc7 + global residual (f32 adds; output lanes are a full multiple of 128)
    s = mm(y, w7_ref[...])                                       # (N, B*Fi_p)
    o_ref[...] = mm(att7_ref[...], s) + b7_ref[...] + x


# ---------------------------------------------------------------------------
# Wrapper-level parameter re-layout (tiny tensors, done at trace time)
# ---------------------------------------------------------------------------

def _round_up(v, m):
    return ((v + m - 1) // m) * m


def _pad_feat(f, batch):
    """Smallest Fp >= f such that batch * Fp is a multiple of 128 lanes."""
    step = 128 // math.gcd(batch, 128)
    return _round_up(f, step)


def _pad2(w, rows, cols):
    return jnp.pad(w, ((0, rows - w.shape[0]), (0, cols - w.shape[1])))


def _block_diag(w, batch):
    """kron(I_batch, w): (Fin, Fout) -> (batch*Fin, batch*Fout)."""
    fin, fout = w.shape
    eye = jnp.eye(batch, dtype=w.dtype)
    return (eye[:, None, :, None] * w[None, :, None, :]).reshape(batch * fin,
                                                                 batch * fout)


def _bn_scale_shift(bn_params, node_n, feat, feat_pad, batch, eps=1e-5):
    """Eval-mode BN over flattened (node_n*feat), in padded (N, B*feat_pad) layout.

    Padding lanes get scale = shift = 0 so they stay exactly zero through tanh.
    """
    gamma, beta, mean, var = bn_params
    scale = gamma * jax.lax.rsqrt(var + eps)
    shift = beta - mean * scale
    scale = jnp.pad(scale.reshape(node_n, feat), ((0, 0), (0, feat_pad - feat)))
    shift = jnp.pad(shift.reshape(node_n, feat), ((0, 0), (0, feat_pad - feat)))
    return jnp.tile(scale, (1, batch)), jnp.tile(shift, (1, batch))


def gcn_forward(x, params, num_stage, use_bf16=True):
    # TODO(synk): training-mode batch statistics / dropout are not reproduced
    # (inference semantics: running stats + identity dropout).
    assert num_stage >= 1
    b, n, fi = x.shape
    w1, att1, bias1 = params["gc1"]
    fh = w1.shape[1]

    fi_p = _pad_feat(fi, b)          # per-batch padded feature counts -> 128 lanes
    fh_p = _pad_feat(fh, b)
    mxu_dt = jnp.bfloat16 if use_bf16 else jnp.float32

    # Activation layout: (N, B*Fp); column block bb <-> batch element bb.
    x_l = jnp.pad(jnp.transpose(x, (1, 0, 2)),
                  ((0, 0), (0, 0), (0, fi_p - fi))).reshape(n, b * fi_p)

    w1_blk = _block_diag(_pad2(w1, fi_p, fh_p), b).astype(mxu_dt)
    bn1s, bn1b = _bn_scale_shift(params["bn1"], n, fh, fh_p, b)
    bias1_l = jnp.tile(jnp.pad(bias1, (0, fh_p - fh)), b)[None, :]
    bn1b = bias1_l * bn1s + bn1b                                 # fold gc1 bias

    att2_l, w2a_l, w2b_l = [], [], []
    bnAs_l, bnAb_l, bnBs_l, bnBb_l = [], [], [], []
    c_coeffs = []
    alpha = 0.5
    for i in range(num_stage):
        blk = params["gcbs"][i]
        w2, att2, bias2 = blk["gc2"]
        theta = math.log(1.4 / (i + 1) + 1.0)                    # lamda = 1.4, l = i+1
        c_coeffs.append(float((1.0 - theta) * alpha))
        att2_l.append(att2.astype(mxu_dt))
        w2a_l.append((theta * _block_diag(_pad2(w2[:fh], fh_p, fh_p), b)).astype(mxu_dt))
        w2b_l.append((theta * _block_diag(_pad2(w2[fh:], fh_p, fh_p), b)).astype(mxu_dt))
        sA, shA = _bn_scale_shift(blk["bn1"], n, fh, fh_p, b)
        sB, shB = _bn_scale_shift(blk["bn2"], n, fh, fh_p, b)
        b2t = jnp.tile(jnp.pad(bias2, (0, fh_p - fh)), b)[None, :]
        bnAs_l.append(sA)
        bnAb_l.append(b2t * sA + shA)                            # fold gc2 bias
        bnBs_l.append(sB)
        bnBb_l.append(b2t * sB + shB)

    w7, att7, bias7 = params["gc7"]
    w7_blk = _block_diag(_pad2(w7, fh_p, fi_p), b).astype(mxu_dt)
    b7_l = jnp.tile(jnp.pad(bias7, (0, fi_p - fi)), b)[None, :]  # (1, B*Fi_p)

    out_l = pl.pallas_call(
        functools.partial(_fused_gcn_kernel, c_coeffs=tuple(c_coeffs)),
        out_shape=jax.ShapeDtypeStruct((n, b * fi_p), jnp.float32),
        # Output reuses x_l's HBM buffer (same shape/dtype; x is consumed first).
        input_output_aliases={0: 0},
    )(x_l, w1_blk, att1.astype(mxu_dt), bn1s, bn1b,
      jnp.stack(att2_l), jnp.stack(w2a_l), jnp.stack(w2b_l),
      jnp.stack(bnAs_l), jnp.stack(bnAb_l), jnp.stack(bnBs_l), jnp.stack(bnBb_l),
      w7_blk, att7.astype(mxu_dt), b7_l)

    out = out_l.reshape(n, b, fi_p)[:, :, :fi]                   # drop zero pad lanes
    return jnp.transpose(out, (1, 0, 2))                         # (B, N, Fi)


# ---------------------------------------------------------------------------
# Parameter init (deterministic, mirrors reset_parameters of the PyTorch code)
# ---------------------------------------------------------------------------

def _uniform(key, shape, stdv):
    return jax.random.uniform(key, shape, jnp.float32, -stdv, stdv)


def init_gcn_params(key, input_feature, hidden_feature, num_stage, node_n):
    params = {}
    keys = jax.random.split(key, 8 + 4 * num_stage)
    ki = iter(range(len(keys)))

    def nxt():
        return keys[next(ki)]

    def bn_init(size):
        return (jnp.ones((size,), jnp.float32),    # gamma
                jnp.zeros((size,), jnp.float32),   # beta
                jnp.zeros((size,), jnp.float32),   # running mean
                jnp.ones((size,), jnp.float32))    # running var

    # gc1: GraphConvolution_O(input_feature -> hidden_feature)
    stdv = 1.0 / math.sqrt(hidden_feature)
    params["gc1"] = (_uniform(nxt(), (input_feature, hidden_feature), stdv),
                     _uniform(nxt(), (node_n, node_n), stdv),
                     _uniform(nxt(), (hidden_feature,), stdv))
    params["bn1"] = bn_init(node_n * hidden_feature)

    # GC_Blocks (the PyTorch block uses gc2 twice; its inner gc1 is unused)
    params["gcbs"] = []
    for _ in range(num_stage):
        stdv = 1.0 / math.sqrt(hidden_feature)
        gc2 = (_uniform(nxt(), (2 * hidden_feature, hidden_feature), stdv),
               _uniform(nxt(), (node_n, node_n), stdv),
               _uniform(nxt(), (hidden_feature,), stdv))
        params["gcbs"].append({
            "gc2": gc2,
            "bn1": bn_init(node_n * hidden_feature),
            "bn2": bn_init(node_n * hidden_feature),
        })

    # gc7: GraphConvolution_O(hidden_feature -> input_feature)
    stdv = 1.0 / math.sqrt(input_feature)
    params["gc7"] = (_uniform(nxt(), (hidden_feature, input_feature), stdv),
                     _uniform(nxt(), (node_n, node_n), stdv),
                     _uniform(nxt(), (input_feature,), stdv))
    return params


# ---------------------------------------------------------------------------
# Pure-JAX reference (mirrors the PyTorch module, eval BN + identity dropout)
# ---------------------------------------------------------------------------

def _ref_graph_conv_o(x, w, att, bias):
    support = jnp.einsum('bnf,fg->bng', x, w)
    return jnp.einsum('nm,bmg->bng', att, support) + bias


def _ref_graph_conv_variant(x, h0, w, att, bias, theta, alpha=0.5):
    hi = jnp.einsum('nm,bmf->bnf', att, x)
    support = jnp.concatenate([hi, h0], axis=-1)
    r = (1.0 - alpha) * hi + alpha * h0
    return theta * jnp.einsum('bnf,fg->bng', support, w) + (1.0 - theta) * r + bias


def _ref_bn_tanh(x3, bn, eps=1e-5):
    b, n, f = x3.shape
    gamma, beta, mean, var = bn
    y = (x3.reshape(b, n * f) - mean) * jax.lax.rsqrt(var + eps) * gamma + beta
    return jnp.tanh(y).reshape(b, n, f)


def gcn_forward_ref(x, params, num_stage):
    y = _ref_graph_conv_o(x, *params["gc1"])
    y = _ref_bn_tanh(y, params["bn1"])
    h0 = y
    for i in range(num_stage):
        blk = params["gcbs"][i]
        theta = math.log(1.4 / (i + 1) + 1.0)
        z = _ref_graph_conv_variant(y, h0, *blk["gc2"], theta=theta)
        z = _ref_bn_tanh(z, blk["bn1"])
        z = _ref_graph_conv_variant(z, h0, *blk["gc2"], theta=theta)
        z = _ref_bn_tanh(z, blk["bn2"])
        y = z + y
    y = _ref_graph_conv_o(y, *params["gc7"])
    return y + x


# ---------------------------------------------------------------------------
# Main
# ---------------------------------------------------------------------------

if __name__ == "__main__":
    batch = 2
    node_n = 48
    input_feature = 16
    hidden_feature = 32
    num_stage = 1

    key = jax.random.PRNGKey(0)
    k_x, k_p = jax.random.split(key)
    x = jax.random.normal(k_x, (batch, node_n, input_feature), dtype=jnp.float32)
    params = init_gcn_params(k_p, input_feature, hidden_feature, num_stage, node_n)

    ref = gcn_forward_ref(x, params, num_stage)

    # Exact f32 path: bit-equivalent computation (padding lanes are zero), tight check.
    fwd_f32 = jax.jit(functools.partial(gcn_forward, num_stage=num_stage,
                                        use_bf16=False))
    out_f32 = jax.block_until_ready(fwd_f32(x, params))
    assert out_f32.shape == (batch, node_n, input_feature)
    assert jnp.all(jnp.isfinite(out_f32))
    assert jnp.allclose(out_f32, ref, atol=1e-3, rtol=1e-3), \
        float(jnp.max(jnp.abs(out_f32 - ref)))

    # Default fast path: bf16 MXU operands, f32 accumulation + f32 epilogue.
    # Looser tolerance accounts for bf16 operand rounding (~0.4% relative).
    fwd_bf16 = jax.jit(functools.partial(gcn_forward, num_stage=num_stage,
                                         use_bf16=True))
    out_bf16 = jax.block_until_ready(fwd_bf16(x, params))
    assert out_bf16.shape == (batch, node_n, input_feature)
    assert jnp.all(jnp.isfinite(out_bf16))
    assert jnp.allclose(out_bf16, ref, atol=3e-2, rtol=3e-2), \
        float(jnp.max(jnp.abs(out_bf16 - ref)))

    print("KERNEL_OK")
</pallas_src>

<mosaic_0001>
module attributes {stable_mosaic.version = 11 : i64} {
  func.func @_fused_gcn_kernel(%arg0: memref<48x128xf32, #tpu.memory_space<vmem>>, %arg1: memref<128x128xf32, #tpu.memory_space<vmem>>, %arg2: memref<48x48xf32, #tpu.memory_space<vmem>>, %arg3: memref<48x128xf32, #tpu.memory_space<vmem>>, %arg4: memref<48x128xf32, #tpu.memory_space<vmem>>, %arg5: memref<1x48x48xf32, #tpu.memory_space<vmem>>, %arg6: memref<1x128x128xf32, #tpu.memory_space<vmem>>, %arg7: memref<1x128x128xf32, #tpu.memory_space<vmem>>, %arg8: memref<1x48x128xf32, #tpu.memory_space<vmem>>, %arg9: memref<1x48x128xf32, #tpu.memory_space<vmem>>, %arg10: memref<1x48x128xf32, #tpu.memory_space<vmem>>, %arg11: memref<1x48x128xf32, #tpu.memory_space<vmem>>, %arg12: memref<128x128xf32, #tpu.memory_space<vmem>>, %arg13: memref<48x48xf32, #tpu.memory_space<vmem>>, %arg14: memref<1x128xf32, #tpu.memory_space<vmem>>, %arg15: memref<48x128xf32, #tpu.memory_space<vmem>>) attributes {dimension_semantics = [], scalar_prefetch = 0 : i64, scratch_operands = 0 : i64, tpu.core_type = #tpu.core_type<tc>} {
    %c0 = arith.constant 0 : index
    %c0_0 = arith.constant 0 : index
    %0 = vector.load %arg0[%c0, %c0_0] : memref<48x128xf32, #tpu.memory_space<vmem>>, vector<48x128xf32>
    %c0_1 = arith.constant 0 : index
    %c0_2 = arith.constant 0 : index
    %1 = vector.load %arg1[%c0_1, %c0_2] : memref<128x128xf32, #tpu.memory_space<vmem>>, vector<128x128xf32>
    %cst = arith.constant dense<0.000000e+00> : vector<48x128xf32>
    %2 = tpu.matmul %0, %1, %cst {dimension_numbers = #tpu.dot_dimension_numbers<[1], [0], [0], [1], [0, 0, 1, 1], [], []>} : vector<48x128xf32>, vector<128x128xf32>, vector<48x128xf32> -> vector<48x128xf32>
    %c0_3 = arith.constant 0 : index
    %c0_4 = arith.constant 0 : index
    %3 = vector.load %arg2[%c0_3, %c0_4] : memref<48x48xf32, #tpu.memory_space<vmem>>, vector<48x48xf32>
    %cst_5 = arith.constant dense<0.000000e+00> : vector<48x128xf32>
    %4 = tpu.matmul %3, %2, %cst_5 {dimension_numbers = #tpu.dot_dimension_numbers<[1], [0], [0], [1], [0, 0, 1, 1], [], []>} : vector<48x48xf32>, vector<48x128xf32>, vector<48x128xf32> -> vector<48x128xf32>
    %c0_6 = arith.constant 0 : index
    %c0_7 = arith.constant 0 : index
    %5 = vector.load %arg3[%c0_6, %c0_7] : memref<48x128xf32, #tpu.memory_space<vmem>>, vector<48x128xf32>
    %6 = arith.mulf %4, %5 : vector<48x128xf32>
    %c0_8 = arith.constant 0 : index
    %c0_9 = arith.constant 0 : index
    %7 = vector.load %arg4[%c0_8, %c0_9] : memref<48x128xf32, #tpu.memory_space<vmem>>, vector<48x128xf32>
    %8 = arith.addf %6, %7 : vector<48x128xf32>
    %9 = math.tanh %8 : vector<48x128xf32>
    %c0_10 = arith.constant 0 : index
    %c0_11 = arith.constant 0 : index
    %c0_12 = arith.constant 0 : index
    %10 = vector.load %arg5[%c0_10, %c0_11, %c0_12] : memref<1x48x48xf32, #tpu.memory_space<vmem>>, vector<1x48x48xf32>
    %11 = vector.shape_cast %10 : vector<1x48x48xf32> to vector<48x48xf32>
    %c0_13 = arith.constant 0 : index
    %c0_14 = arith.constant 0 : index
    %c0_15 = arith.constant 0 : index
    %12 = vector.load %arg6[%c0_13, %c0_14, %c0_15] : memref<1x128x128xf32, #tpu.memory_space<vmem>>, vector<1x128x128xf32>
    %13 = vector.shape_cast %12 : vector<1x128x128xf32> to vector<128x128xf32>
    %c0_16 = arith.constant 0 : index
    %c0_17 = arith.constant 0 : index
    %c0_18 = arith.constant 0 : index
    %14 = vector.load %arg7[%c0_16, %c0_17, %c0_18] : memref<1x128x128xf32, #tpu.memory_space<vmem>>, vector<1x128x128xf32>
    %15 = vector.shape_cast %14 : vector<1x128x128xf32> to vector<128x128xf32>
    %cst_19 = arith.constant dense<0.000000e+00> : vector<48x128xf32>
    %16 = tpu.matmul %9, %15, %cst_19 {dimension_numbers = #tpu.dot_dimension_numbers<[1], [0], [0], [1], [0, 0, 1, 1], [], []>} : vector<48x128xf32>, vector<128x128xf32>, vector<48x128xf32> -> vector<48x128xf32>
    %cst_20 = arith.constant 0.0622656308 : f32
    %17 = vector.broadcast %cst_20 : f32 to vector<48x128xf32>
    %18 = arith.mulf %17, %9 : vector<48x128xf32>
    %19 = arith.addf %16, %18 : vector<48x128xf32>
    %cst_21 = arith.constant dense<0.000000e+00> : vector<48x128xf32>
    %20 = tpu.matmul %11, %9, %cst_21 {dimension_numbers = #tpu.dot_dimension_numbers<[1], [0], [0], [1], [0, 0, 1, 1], [], []>} : vector<48x48xf32>, vector<48x128xf32>, vector<48x128xf32> -> vector<48x128xf32>
    %cst_22 = arith.constant dense<0.000000e+00> : vector<48x128xf32>
    %21 = tpu.matmul %20, %13, %cst_22 {dimension_numbers = #tpu.dot_dimension_numbers<[1], [0], [0], [1], [0, 0, 1, 1], [], []>} : vector<48x128xf32>, vector<128x128xf32>, vector<48x128xf32> -> vector<48x128xf32>
    %cst_23 = arith.constant 0.0622656308 : f32
    %22 = vector.broadcast %cst_23 : f32 to vector<48x128xf32>
    %23 = arith.mulf %22, %20 : vector<48x128xf32>
    %24 = arith.addf %21, %23 : vector<48x128xf32>
    %25 = arith.addf %24, %19 : vector<48x128xf32>
    %c0_24 = arith.constant 0 : index
    %c0_25 = arith.constant 0 : index
    %c0_26 = arith.constant 0 : index
    %26 = vector.load %arg8[%c0_24, %c0_25, %c0_26] : memref<1x48x128xf32, #tpu.memory_space<vmem>>, vector<1x48x128xf32>
    %27 = vector.shape_cast %26 : vector<1x48x128xf32> to vector<48x128xf32>
    %28 = arith.mulf %25, %27 : vector<48x128xf32>
    %c0_27 = arith.constant 0 : index
    %c0_28 = arith.constant 0 : index
    %c0_29 = arith.constant 0 : index
    %29 = vector.load %arg9[%c0_27, %c0_28, %c0_29] : memref<1x48x128xf32, #tpu.memory_space<vmem>>, vector<1x48x128xf32>
    %30 = vector.shape_cast %29 : vector<1x48x128xf32> to vector<48x128xf32>
    %31 = arith.addf %28, %30 : vector<48x128xf32>
    %32 = math.tanh %31 : vector<48x128xf32>
    %cst_30 = arith.constant dense<0.000000e+00> : vector<48x128xf32>
    %33 = tpu.matmul %11, %32, %cst_30 {dimension_numbers = #tpu.dot_dimension_numbers<[1], [0], [0], [1], [0, 0, 1, 1], [], []>} : vector<48x48xf32>, vector<48x128xf32>, vector<48x128xf32> -> vector<48x128xf32>
    %cst_31 = arith.constant dense<0.000000e+00> : vector<48x128xf32>
    %34 = tpu.matmul %33, %13, %cst_31 {dimension_numbers = #tpu.dot_dimension_numbers<[1], [0], [0], [1], [0, 0, 1, 1], [], []>} : vector<48x128xf32>, vector<128x128xf32>, vector<48x128xf32> -> vector<48x128xf32>
    %cst_32 = arith.constant 0.0622656308 : f32
    %35 = vector.broadcast %cst_32 : f32 to vector<48x128xf32>
    %36 = arith.mulf %35, %33 : vector<48x128xf32>
    %37 = arith.addf %34, %36 : vector<48x128xf32>
    %38 = arith.addf %37, %19 : vector<48x128xf32>
    %c0_33 = arith.constant 0 : index
    %c0_34 = arith.constant 0 : index
    %c0_35 = arith.constant 0 : index
    %39 = vector.load %arg10[%c0_33, %c0_34, %c0_35] : memref<1x48x128xf32, #tpu.memory_space<vmem>>, vector<1x48x128xf32>
    %40 = vector.shape_cast %39 : vector<1x48x128xf32> to vector<48x128xf32>
    %41 = arith.mulf %38, %40 : vector<48x128xf32>
    %c0_36 = arith.constant 0 : index
    %c0_37 = arith.constant 0 : index
    %c0_38 = arith.constant 0 : index
    %42 = vector.load %arg11[%c0_36, %c0_37, %c0_38] : memref<1x48x128xf32, #tpu.memory_space<vmem>>, vector<1x48x128xf32>
    %43 = vector.shape_cast %42 : vector<1x48x128xf32> to vector<48x128xf32>
    %44 = arith.addf %41, %43 : vector<48x128xf32>
    %45 = math.tanh %44 : vector<48x128xf32>
    %46 = arith.addf %45, %9 : vector<48x128xf32>
    %c0_39 = arith.constant 0 : index
    %c0_40 = arith.constant 0 : index
    %47 = vector.load %arg12[%c0_39, %c0_40] : memref<128x128xf32, #tpu.memory_space<vmem>>, vector<128x128xf32>
    %cst_41 = arith.constant dense<0.000000e+00> : vector<48x128xf32>
    %48 = tpu.matmul %46, %47, %cst_41 {dimension_numbers = #tpu.dot_dimension_numbers<[1], [0], [0], [1], [0, 0, 1, 1], [], []>} : vector<48x128xf32>, vector<128x128xf32>, vector<48x128xf32> -> vector<48x128xf32>
    %c0_42 = arith.constant 0 : index
    %c0_43 = arith.constant 0 : index
    %49 = vector.load %arg13[%c0_42, %c0_43] : memref<48x48xf32, #tpu.memory_space<vmem>>, vector<48x48xf32>
    %cst_44 = arith.constant dense<0.000000e+00> : vector<48x128xf32>
    %50 = tpu.matmul %49, %48, %cst_44 {dimension_numbers = #tpu.dot_dimension_numbers<[1], [0], [0], [1], [0, 0, 1, 1], [], []>} : vector<48x48xf32>, vector<48x128xf32>, vector<48x128xf32> -> vector<48x128xf32>
    %c0_45 = arith.constant 0 : index
    %c0_46 = arith.constant 0 : index
    %51 = vector.load %arg14[%c0_45, %c0_46] : memref<1x128xf32, #tpu.memory_space<vmem>>, vector<1x128xf32>
    %52 = vector.broadcast %51 : vector<1x128xf32> to vector<48x128xf32>
    %53 = arith.addf %50, %52 : vector<48x128xf32>
    %54 = arith.addf %53, %0 : vector<48x128xf32>
    %c0_47 = arith.constant 0 : index
    %c0_48 = arith.constant 0 : index
    %55 = vector.load %arg15[%c0_47, %c0_48] : memref<48x128xf32, #tpu.memory_space<vmem>>, vector<48x128xf32>
    tpu.vector_store %arg15[%c0_47, %c0_48], %54 {strides = array<i32>} : memref<48x128xf32, #tpu.memory_space<vmem>>, vector<48x128xf32>,
    return
  }
}

</mosaic_0001>

<llo_original>
// kernel: tile.51
$region0: #{tile.51}
  %s0 = inlined_call_operand.vmem [shape: f32[48,2,64], index: 0, kind: input, shape index: {}]
  %s1 = inlined_call_operand.vmem [shape: f32[48,128], index: 1, kind: output, shape index: {}]
  $region1: #{tile.51} parent=0
    #allocation0 [shape = 'u8[196608]{0}', space=vmem, size = 0x30000, scoped, tag = 'scoped mem for input reshape']
    %s3 = sshllo.u32 0, 2
    %s4 = smul.addr 2, 47
    %s5 = scalar_lea.vmem %s0, %s4
    %v6 = vld [vmem:[%s5] sm:%s3]
    %s7 = scalar_lea.vmem [#allocation0], 376
    %8 = vst [vmem:[%s7] sm:%s3] %v6
    %s9 = smul.addr 2, 46
    %s10 = scalar_lea.vmem %s0, %s9
    %v11 = vld [vmem:[%s10] sm:%s3]
    %s12 = scalar_lea.vmem [#allocation0], 368
    %13 = vst [vmem:[%s12] sm:%s3] %v11
    %s14 = smul.addr 2, 45
    %s15 = scalar_lea.vmem %s0, %s14
    %v16 = vld [vmem:[%s15] sm:%s3]
    %s17 = scalar_lea.vmem [#allocation0], 360
    %18 = vst [vmem:[%s17] sm:%s3] %v16
    %s19 = smul.addr 2, 44
    %s20 = scalar_lea.vmem %s0, %s19
    %v21 = vld [vmem:[%s20] sm:%s3]
    %s22 = scalar_lea.vmem [#allocation0], 352
    %23 = vst [vmem:[%s22] sm:%s3] %v21
    %s24 = smul.addr 2, 43
    %s25 = scalar_lea.vmem %s0, %s24
    %v26 = vld [vmem:[%s25] sm:%s3]
    %s27 = scalar_lea.vmem [#allocation0], 344
    %28 = vst [vmem:[%s27] sm:%s3] %v26
    %s29 = smul.addr 2, 42
    %s30 = scalar_lea.vmem %s0, %s29
    %v31 = vld [vmem:[%s30] sm:%s3]
    %s32 = scalar_lea.vmem [#allocation0], 336
    %33 = vst [vmem:[%s32] sm:%s3] %v31
    %s34 = smul.addr 2, 41
    %s35 = scalar_lea.vmem %s0, %s34
    %v36 = vld [vmem:[%s35] sm:%s3]
    %s37 = scalar_lea.vmem [#allocation0], 328
    %38 = vst [vmem:[%s37] sm:%s3] %v36
    %s39 = smul.addr 2, 40
    %s40 = scalar_lea.vmem %s0, %s39
    %v41 = vld [vmem:[%s40] sm:%s3]
    %s42 = scalar_lea.vmem [#allocation0], 320
    %43 = vst [vmem:[%s42] sm:%s3] %v41
    %s44 = smul.addr 2, 39
    %s45 = scalar_lea.vmem %s0, %s44
    %v46 = vld [vmem:[%s45] sm:%s3]
    %s47 = scalar_lea.vmem [#allocation0], 312
    %48 = vst [vmem:[%s47] sm:%s3] %v46
    %s49 = smul.addr 2, 38
    %s50 = scalar_lea.vmem %s0, %s49
    %v51 = vld [vmem:[%s50] sm:%s3]
    %s52 = scalar_lea.vmem [#allocation0], 304
    %53 = vst [vmem:[%s52] sm:%s3] %v51
    %s54 = smul.addr 2, 37
    %s55 = scalar_lea.vmem %s0, %s54
    %v56 = vld [vmem:[%s55] sm:%s3]
    %s57 = scalar_lea.vmem [#allocation0], 296
    %58 = vst [vmem:[%s57] sm:%s3] %v56
    %s59 = smul.addr 2, 36
    %s60 = scalar_lea.vmem %s0, %s59
    %v61 = vld [vmem:[%s60] sm:%s3]
    %s62 = scalar_lea.vmem [#allocation0], 288
    %63 = vst [vmem:[%s62] sm:%s3] %v61
    %s64 = smul.addr 2, 35
    %s65 = scalar_lea.vmem %s0, %s64
    %v66 = vld [vmem:[%s65] sm:%s3]
    %s67 = scalar_lea.vmem [#allocation0], 280
    %68 = vst [vmem:[%s67] sm:%s3] %v66
    %s69 = smul.addr 2, 34
    %s70 = scalar_lea.vmem %s0, %s69
    %v71 = vld [vmem:[%s70] sm:%s3]
    %s72 = scalar_lea.vmem [#allocation0], 272
    %73 = vst [vmem:[%s72] sm:%s3] %v71
    %s74 = smul.addr 2, 33
    %s75 = scalar_lea.vmem %s0, %s74
    %v76 = vld [vmem:[%s75] sm:%s3]
    %s77 = scalar_lea.vmem [#allocation0], 264
    %78 = vst [vmem:[%s77] sm:%s3] %v76
    %s79 = smul.addr 2, 32
    %s80 = scalar_lea.vmem %s0, %s79
    %v81 = vld [vmem:[%s80] sm:%s3]
    %s82 = scalar_lea.vmem [#allocation0], 256
    %83 = vst [vmem:[%s82] sm:%s3] %v81
    %s84 = smul.addr 2, 31
    %s85 = scalar_lea.vmem %s0, %s84
    %v86 = vld [vmem:[%s85] sm:%s3]
    %s87 = scalar_lea.vmem [#allocation0], 248
    %88 = vst [vmem:[%s87] sm:%s3] %v86
    %s89 = smul.addr 2, 30
    %s90 = scalar_lea.vmem %s0, %s89
    %v91 = vld [vmem:[%s90] sm:%s3]
    %s92 = scalar_lea.vmem [#allocation0], 240
    %93 = vst [vmem:[%s92] sm:%s3] %v91
    %s94 = smul.addr 2, 29
    %s95 = scalar_lea.vmem %s0, %s94
    %v96 = vld [vmem:[%s95] sm:%s3]
    %s97 = scalar_lea.vmem [#allocation0], 232
    %98 = vst [vmem:[%s97] sm:%s3] %v96
    %s99 = smul.addr 2, 28
    %s100 = scalar_lea.vmem %s0, %s99
    %v101 = vld [vmem:[%s100] sm:%s3]
    %s102 = scalar_lea.vmem [#allocation0], 224
    %103 = vst [vmem:[%s102] sm:%s3] %v101
    %s104 = smul.addr 2, 27
    %s105 = scalar_lea.vmem %s0, %s104
    %v106 = vld [vmem:[%s105] sm:%s3]
    %s107 = scalar_lea.vmem [#allocation0], 216
    %108 = vst [vmem:[%s107] sm:%s3] %v106
    %s109 = smul.addr 2, 26
    %s110 = scalar_lea.vmem %s0, %s109
    %v111 = vld [vmem:[%s110] sm:%s3]
    %s112 = scalar_lea.vmem [#allocation0], 208
    %113 = vst [vmem:[%s112] sm:%s3] %v111
    %s114 = smul.addr 2, 25
    %s115 = scalar_lea.vmem %s0, %s114
    %v116 = vld [vmem:[%s115] sm:%s3]
    %s117 = scalar_lea.vmem [#allocation0], 200
    %118 = vst [vmem:[%s117] sm:%s3] %v116
    %s119 = smul.addr 2, 24
    %s120 = scalar_lea.vmem %s0, %s119
    %v121 = vld [vmem:[%s120] sm:%s3]
    %s122 = scalar_lea.vmem [#allocation0], 192
    %123 = vst [vmem:[%s122] sm:%s3] %v121
    %s124 = smul.addr 2, 23
    %s125 = scalar_lea.vmem %s0, %s124
    %v126 = vld [vmem:[%s125] sm:%s3]
    %s127 = scalar_lea.vmem [#allocation0], 184
    %128 = vst [vmem:[%s127] sm:%s3] %v126
    %s129 = smul.addr 2, 22
    %s130 = scalar_lea.vmem %s0, %s129
    %v131 = vld [vmem:[%s130] sm:%s3]
    %s132 = scalar_lea.vmem [#allocation0], 176
    %133 = vst [vmem:[%s132] sm:%s3] %v131
    %s134 = smul.addr 2, 21
    %s135 = scalar_lea.vmem %s0, %s134
    %v136 = vld [vmem:[%s135] sm:%s3]
    %s137 = scalar_lea.vmem [#allocation0], 168
    %138 = vst [vmem:[%s137] sm:%s3] %v136
    %s139 = smul.addr 2, 20
    %s140 = scalar_lea.vmem %s0, %s139
    %v141 = vld [vmem:[%s140] sm:%s3]
    %s142 = scalar_lea.vmem [#allocation0], 160
    %143 = vst [vmem:[%s142] sm:%s3] %v141
    %s144 = smul.addr 2, 19
    %s145 = scalar_lea.vmem %s0, %s144
    %v146 = vld [vmem:[%s145] sm:%s3]
    %s147 = scalar_lea.vmem [#allocation0], 152
    %148 = vst [vmem:[%s147] sm:%s3] %v146
    %s149 = smul.addr 2, 18
    %s150 = scalar_lea.vmem %s0, %s149
    %v151 = vld [vmem:[%s150] sm:%s3]
    %s152 = scalar_lea.vmem [#allocation0], 144
    %153 = vst [vmem:[%s152] sm:%s3] %v151
    %s154 = smul.addr 2, 17
    %s155 = scalar_lea.vmem %s0, %s154
    %v156 = vld [vmem:[%s155] sm:%s3]
    %s157 = scalar_lea.vmem [#allocation0], 136
    %158 = vst [vmem:[%s157] sm:%s3] %v156
    %s159 = smul.addr 2, 16
    %s160 = scalar_lea.vmem %s0, %s159
    %v161 = vld [vmem:[%s160] sm:%s3]
    %s162 = scalar_lea.vmem [#allocation0], 128
    %163 = vst [vmem:[%s162] sm:%s3] %v161
    %s164 = smul.addr 2, 15
    %s165 = scalar_lea.vmem %s0, %s164
    %v166 = vld [vmem:[%s165] sm:%s3]
    %s167 = scalar_lea.vmem [#allocation0], 120
    %168 = vst [vmem:[%s167] sm:%s3] %v166
    %s169 = smul.addr 2, 14
    %s170 = scalar_lea.vmem %s0, %s169
    %v171 = vld [vmem:[%s170] sm:%s3]
    %s172 = scalar_lea.vmem [#allocation0], 112
    %173 = vst [vmem:[%s172] sm:%s3] %v171
    %s174 = smul.addr 2, 13
    %s175 = scalar_lea.vmem %s0, %s174
    %v176 = vld [vmem:[%s175] sm:%s3]
    %s177 = scalar_lea.vmem [#allocation0], 104
    %178 = vst [vmem:[%s177] sm:%s3] %v176
    %s179 = smul.addr 2, 12
    %s180 = scalar_lea.vmem %s0, %s179
    %v181 = vld [vmem:[%s180] sm:%s3]
    %s182 = scalar_lea.vmem [#allocation0], 96
    %183 = vst [vmem:[%s182] sm:%s3] %v181
    %s184 = smul.addr 2, 11
    %s185 = scalar_lea.vmem %s0, %s184
    %v186 = vld [vmem:[%s185] sm:%s3]
    %s187 = scalar_lea.vmem [#allocation0], 88
    %188 = vst [vmem:[%s187] sm:%s3] %v186
    %s189 = smul.addr 2, 10
    %s190 = scalar_lea.vmem %s0, %s189
    %v191 = vld [vmem:[%s190] sm:%s3]
    %s192 = scalar_lea.vmem [#allocation0], 80
    %193 = vst [vmem:[%s192] sm:%s3] %v191
    %s194 = smul.addr 2, 9
    %s195 = scalar_lea.vmem %s0, %s194
    %v196 = vld [vmem:[%s195] sm:%s3]
    %s197 = scalar_lea.vmem [#allocation0], 72
    %198 = vst [vmem:[%s197] sm:%s3] %v196
    %s199 = smul.addr 2, 8
    %s200 = scalar_lea.vmem %s0, %s199
    %v201 = vld [vmem:[%s200] sm:%s3]
    %s202 = scalar_lea.vmem [#allocation0], 64
    %203 = vst [vmem:[%s202] sm:%s3] %v201
    %s204 = smul.addr 2, 7
    %s205 = scalar_lea.vmem %s0, %s204
    %v206 = vld [vmem:[%s205] sm:%s3]
    %s207 = scalar_lea.vmem [#allocation0], 56
    %208 = vst [vmem:[%s207] sm:%s3] %v206
    %s209 = smul.addr 2, 6
    %s210 = scalar_lea.vmem %s0, %s209
    %v211 = vld [vmem:[%s210] sm:%s3]
    %s212 = scalar_lea.vmem [#allocation0], 48
    %213 = vst [vmem:[%s212] sm:%s3] %v211
    %s214 = smul.addr 2, 5
    %s215 = scalar_lea.vmem %s0, %s214
    %v216 = vld [vmem:[%s215] sm:%s3]
    %s217 = scalar_lea.vmem [#allocation0], 40
    %218 = vst [vmem:[%s217] sm:%s3] %v216
    %s219 = smul.addr 2, 4
    %s220 = scalar_lea.vmem %s0, %s219
    %v221 = vld [vmem:[%s220] sm:%s3]
    %s222 = scalar_lea.vmem [#allocation0], 32
    %223 = vst [vmem:[%s222] sm:%s3] %v221
    %s224 = smul.addr 2, 3
    %s225 = scalar_lea.vmem %s0, %s224
    %v226 = vld [vmem:[%s225] sm:%s3]
    %s227 = scalar_lea.vmem [#allocation0], 24
    %228 = vst [vmem:[%s227] sm:%s3] %v226
    %s229 = smul.addr 2, 2
    %s230 = scalar_lea.vmem %s0, %s229
    %v231 = vld [vmem:[%s230] sm:%s3]
    %s232 = scalar_lea.vmem [#allocation0], 16
    %233 = vst [vmem:[%s232] sm:%s3] %v231
    %s234 = scalar_lea.vmem %s0, 2
    %v235 = vld [vmem:[%s234] sm:%s3]
    %s236 = scalar_lea.vmem [#allocation0], 8
    %237 = vst [vmem:[%s236] sm:%s3] %v235
    %v238 = vld [vmem:[%s0] sm:%s3]
    %239 = vst [vmem:[#allocation0] sm:%s3] %v238
    %v240 = vld [vmem:[#allocation0] ss:$8 sm:$0xf]
    %v241 = vld [vmem:[#allocation0] ss:$8 sm:$0xf0]
    %vm242 = vcmask 1047556
    %v243 = vsel %vm242, %v241, %v240
    %vm244 = vcmask 523264
    %245 = vst.msk [vmem:[%s1] sm:$0xff] %vm244, %v243
    %s246 = scalar_lea.vmem [#allocation0], 64
    %v247 = vld [vmem:[%s246] ss:$8 sm:$0xf]
    %s248 = scalar_lea.vmem [#allocation0], 64
    %v249 = vld [vmem:[%s248] ss:$8 sm:$0xf0]
    %vm250 = vcmask 1047556
    %v251 = vsel %vm250, %v249, %v247
    %vm252 = vcmask 523264
    %s253 = scalar_lea.vmem %s1, 8
    %254 = vst.msk [vmem:[%s253] sm:$0xff] %vm252, %v251
    %s255 = scalar_lea.vmem [#allocation0], 128
    %v256 = vld [vmem:[%s255] ss:$8 sm:$0xf]
    %s257 = scalar_lea.vmem [#allocation0], 128
    %v258 = vld [vmem:[%s257] ss:$8 sm:$0xf0]
    %vm259 = vcmask 1047556
    %v260 = vsel %vm259, %v258, %v256
    %vm261 = vcmask 523264
    %s262 = scalar_lea.vmem %s1, 16
    %263 = vst.msk [vmem:[%s262] sm:$0xff] %vm261, %v260
    %s264 = scalar_lea.vmem [#allocation0], 192
    %v265 = vld [vmem:[%s264] ss:$8 sm:$0xf]
    %s266 = scalar_lea.vmem [#allocation0], 192
    %v267 = vld [vmem:[%s266] ss:$8 sm:$0xf0]
    %vm268 = vcmask 1047556
    %v269 = vsel %vm268, %v267, %v265
    %vm270 = vcmask 523264
    %s271 = scalar_lea.vmem %s1, 24
    %272 = vst.msk [vmem:[%s271] sm:$0xff] %vm270, %v269
    %s273 = scalar_lea.vmem [#allocation0], 256
    %v274 = vld [vmem:[%s273] ss:$8 sm:$0xf]
    %s275 = scalar_lea.vmem [#allocation0], 256
    %v276 = vld [vmem:[%s275] ss:$8 sm:$0xf0]
    %vm277 = vcmask 1047556
    %v278 = vsel %vm277, %v276, %v274
    %vm279 = vcmask 523264
    %s280 = scalar_lea.vmem %s1, 32
    %281 = vst.msk [vmem:[%s280] sm:$0xff] %vm279, %v278
    %s282 = scalar_lea.vmem [#allocation0], 320
    %v283 = vld [vmem:[%s282] ss:$8 sm:$0xf]
    %s284 = scalar_lea.vmem [#allocation0], 320
    %v285 = vld [vmem:[%s284] ss:$8 sm:$0xf0]
    %vm286 = vcmask 1047556
    %v287 = vsel %vm286, %v285, %v283
    %vm288 = vcmask 523264
    %s289 = scalar_lea.vmem %s1, 40
    %290 = vst.msk [vmem:[%s289] sm:$0xff] %vm288, %v287
    %s291 = scalar_lea.vmem [#allocation0], 1
    %v292 = vld [vmem:[%s291] ss:$8 sm:$0xf]
    %s293 = scalar_lea.vmem [#allocation0], 1
    %v294 = vld [vmem:[%s293] ss:$8 sm:$0xf0]
    %vm295 = vcmask 1047556
    %v296 = vsel %vm295, %v294, %v292
    %297 = vrot.lane.b32.xlu0 %v296, 64
    %v298 = vpop.permute.xlu0 %297
    %vm299 = vcmask 1048064
    %300 = vst.msk [vmem:[%s1] sm:$0xff] %vm299, %v298
    %s301 = scalar_lea.vmem [#allocation0], 257
    %v302 = vld [vmem:[%s301] ss:$8 sm:$0xf]
    %s303 = scalar_lea.vmem [#allocation0], 257
    %v304 = vld [vmem:[%s303] ss:$8 sm:$0xf0]
    %vm305 = vcmask 1047556
    %v306 = vsel %vm305, %v304, %v302
    %307 = vrot.lane.b32.xlu0 %v306, 64
    %v308 = vpop.permute.xlu0 %307
    %vm309 = vcmask 1048064
    %s310 = scalar_lea.vmem %s1, 32
    %311 = vst.msk [vmem:[%s310] sm:$0xff] %vm309, %v308
    %s312 = scalar_lea.vmem [#allocation0], 65
    %v313 = vld [vmem:[%s312] ss:$8 sm:$0xf]
    %s314 = scalar_lea.vmem [#allocation0], 65
    %v315 = vld [vmem:[%s314] ss:$8 sm:$0xf0]
    %vm316 = vcmask 1047556
    %v317 = vsel %vm316, %v315, %v313
    %318 = vrot.lane.b32.xlu0 %v317, 64
    %v319 = vpop.permute.xlu0 %318
    %vm320 = vcmask 1048064
    %s321 = scalar_lea.vmem %s1, 8
    %322 = vst.msk [vmem:[%s321] sm:$0xff] %vm320, %v319
    %s323 = scalar_lea.vmem [#allocation0], 321
    %v324 = vld [vmem:[%s323] ss:$8 sm:$0xf]
    %s325 = scalar_lea.vmem [#allocation0], 321
    %v326 = vld [vmem:[%s325] ss:$8 sm:$0xf0]
    %vm327 = vcmask 1047556
    %v328 = vsel %vm327, %v326, %v324
    %329 = vrot.lane.b32.xlu0 %v328, 64
    %v330 = vpop.permute.xlu0 %329
    %vm331 = vcmask 1048064
    %s332 = scalar_lea.vmem %s1, 40
    %333 = vst.msk [vmem:[%s332] sm:$0xff] %vm331, %v330
    %s334 = scalar_lea.vmem [#allocation0], 129
    %v335 = vld [vmem:[%s334] ss:$8 sm:$0xf]
    %s336 = scalar_lea.vmem [#allocation0], 129
    %v337 = vld [vmem:[%s336] ss:$8 sm:$0xf0]
    %vm338 = vcmask 1047556
    %v339 = vsel %vm338, %v337, %v335
    %340 = vrot.lane.b32.xlu0 %v339, 64
    %v341 = vpop.permute.xlu0 %340
    %vm342 = vcmask 1048064
    %s343 = scalar_lea.vmem %s1, 16
    %344 = vst.msk [vmem:[%s343] sm:$0xff] %vm342, %v341
    %s345 = scalar_lea.vmem [#allocation0], 193
    %v346 = vld [vmem:[%s345] ss:$8 sm:$0xf]
    %s347 = scalar_lea.vmem [#allocation0], 193
    %v348 = vld [vmem:[%s347] ss:$8 sm:$0xf0]
    %vm349 = vcmask 1047556
    %v350 = vsel %vm349, %v348, %v346
    %351 = vrot.lane.b32.xlu0 %v350, 64
    %v352 = vpop.permute.xlu0 %351
    %vm353 = vcmask 1048064
    %s354 = scalar_lea.vmem %s1, 24
    %355 = vst.msk [vmem:[%s354] sm:$0xff] %vm353, %v352

// kernel: tile.60
$region0: #{tile.60}
  #allocation0 [shape = 's32[1]{0}', space=sflag, size = 0x4, scoped, tag = 'scoped memory for tile.60']
  %s0 = inlined_call_operand.vmem [shape: f32[64], index: 0, kind: input, shape index: {}]
  %s1 = inlined_call_operand.vmem [shape: f32[2,64], index: 1, kind: output, shape index: {}]
  // Predicated region
  $region2: #{tile.60} parent=0 // pred_check
    _
  $region3: #{tile.60} parent=0 // pred_check_branch
    %3 = sbr.rel (0) target = $region5
  $region4: #{tile.60} parent=0 // pred_region
    _
  $region5: #{tile.60} parent=0 // pred_fallthru
    _
  %v4 = vld [vmem:[%s0] ss:$0 sm:$0xff]
  %5 = vst [vmem:[%s1] sm:$0x3] %v4

// kernel: mul.58
$region0: #{mul.58}
  %s0 = inlined_call_operand.vmem [shape: f32[2,64], index: 0, kind: input, shape index: {}]
  %s1 = inlined_call_operand.vmem [shape: f32[128], index: 1, kind: output, shape index: {}]
  $region1: #{mul.58} parent=0
    #allocation0 [shape = 'u8[4096]{0}', space=vmem, size = 0x1000, scoped, tag = 'scoped mem for output reshape']
    #allocation1 [shape = 'u8[4096]{0}', space=vmem, size = 0x1000, scoped, tag = 'scoped mem for input reshape']
    %s3 = sshllo.u32 0, 2
    %v4 = vld [vmem:[%s0] sm:%s3]
    %5 = vst [vmem:[#allocation1] sm:%s3] %v4
    %v6 = vld [vmem:[#allocation1] sm:$0x1]
    %vm7 = vcmask 523264
    %8 = vst.msk [vmem:[#allocation0] sm:$0x1] %vm7, %v6
    %s9 = scalar_lea.vmem [#allocation1], 1
    %v10 = vld [vmem:[%s9] sm:$0x1]
    %11 = vrot.lane.b32.xlu0 %v10, 64
    %v12 = vpop.permute.xlu0 %11
    %vm13 = vcmask 1048064
    %14 = vst.msk [vmem:[#allocation0] sm:$0x1] %vm13, %v12
    %s16 = sshllo.u32 0, 1
    %v18 = vld [vmem:[#allocation0] sm:%s16]
    %s19 = sshllo.u32 0, 1
    %20 = vst [vmem:[%s1] sm:%s19] %v18

// kernel: tile.91
$region0: #{tile.91}
  %s0 = inlined_call_operand.vmem [shape: f32[2,64], index: 0, kind: input, shape index: {}]
  %s1 = inlined_call_operand.vmem [shape: f32[1,128], index: 1, kind: output, shape index: {}]
  $region1: #{tile.91} parent=0
    #allocation0 [shape = 'u8[4096]{0}', space=vmem, size = 0x1000, scoped, tag = 'scoped mem for output reshape']
    #allocation1 [shape = 'u8[4096]{0}', space=vmem, size = 0x1000, scoped, tag = 'scoped mem for input reshape']
    %s3 = sshllo.u32 0, 2
    %v4 = vld [vmem:[%s0] sm:%s3]
    %5 = vst [vmem:[#allocation1] sm:%s3] %v4
    %v6 = vld [vmem:[#allocation1] sm:$0x1]
    %vm7 = vcmask 523264
    %8 = vst.msk [vmem:[#allocation0] sm:$0x1] %vm7, %v6
    %s9 = scalar_lea.vmem [#allocation1], 1
    %v10 = vld [vmem:[%s9] sm:$0x1]
    %11 = vrot.lane.b32.xlu0 %v10, 64
    %v12 = vpop.permute.xlu0 %11
    %vm13 = vcmask 1048064
    %14 = vst.msk [vmem:[#allocation0] sm:$0x1] %vm13, %v12
    %s16 = sshllo.u32 0, 1
    %v18 = vld [vmem:[#allocation0] sm:%s16]
    %s19 = sshllo.u32 0, 1
    %20 = vst [vmem:[%s1] sm:%s19] %v18

// kernel: gcn_forward.1
$region0: #{gcn_forward.1}
  #allocation0 [shape = 'u32[]', space=smem, size = 0x4, offset = 0x4, fixed_abs, tag = 'smem constant byte address 0x4 - core index']
  #allocation1 [shape = 'u32[144,128]{1,0:T(1,128)}', space=vmem, size = 0x12000, scoped, tag = 'internal scratch']
  %s0 = inlined_call_operand.vmem [shape: f32[48,128], index: 0, kind: input, shape index: {}, may-alias: {0,15}]
  %s1 = inlined_call_operand.vmem [shape: f32[128,128], index: 1, kind: input, shape index: {}]
  %s2 = inlined_call_operand.vmem [shape: f32[48,48], index: 2, kind: input, shape index: {}]
  %s3 = inlined_call_operand.vmem [shape: f32[48,128], index: 3, kind: input, shape index: {}]
  %s4 = inlined_call_operand.vmem [shape: f32[48,128], index: 4, kind: input, shape index: {}]
  %s5 = inlined_call_operand.vmem [shape: f32[1,48,48], index: 5, kind: input, shape index: {}]
  %s6 = inlined_call_operand.vmem [shape: f32[1,128,128], index: 6, kind: input, shape index: {}]
  %s7 = inlined_call_operand.vmem [shape: f32[1,128,128], index: 7, kind: input, shape index: {}]
  %s8 = inlined_call_operand.vmem [shape: f32[1,48,128], index: 8, kind: input, shape index: {}]
  %s9 = inlined_call_operand.vmem [shape: f32[1,48,128], index: 9, kind: input, shape index: {}]
  %s10 = inlined_call_operand.vmem [shape: f32[1,48,128], index: 10, kind: input, shape index: {}]
  %s11 = inlined_call_operand.vmem [shape: f32[1,48,128], index: 11, kind: input, shape index: {}]
  %s12 = inlined_call_operand.vmem [shape: f32[128,128], index: 12, kind: input, shape index: {}]
  %s13 = inlined_call_operand.vmem [shape: f32[48,48], index: 13, kind: input, shape index: {}]
  %s14 = inlined_call_operand.vmem [shape: f32[1,128], index: 14, kind: input, shape index: {}]
  %s15 = inlined_call_operand.vmem [shape: f32[48,128], index: 15, kind: output, shape index: {}, may-alias: {0,15}]
  %s16 = sld [smem:[#allocation0]]
  $region70: #{gcn_forward.1} parent=0
    _
  %s18 = ssub.s32 1, %s16
  %s19 = scalar_select 0, %s18, %s16
  // Predicated region
  $region2: #{gcn_forward.1} parent=0 // pred_check
    _
  $region3: #{gcn_forward.1} parent=0 // pred_check_branch
    %21 = sbr.rel (0) target = $region5
  $region4: #{gcn_forward.1} parent=0 // pred_region
    _
  $region5: #{gcn_forward.1} parent=0 // pred_fallthru
    _
  // Predicated region
  $region6: #{gcn_forward.1} parent=0 // pred_check
    _
  $region7: #{gcn_forward.1} parent=0 // pred_check_branch
    %23 = sbr.rel (0) target = $region9
  $region8: #{gcn_forward.1} parent=0 // pred_region
    _
  $region9: #{gcn_forward.1} parent=0 // pred_fallthru
    _
  // Predicated region
  $region10: #{gcn_forward.1} parent=0 // pred_check
    _
  $region11: #{gcn_forward.1} parent=0 // pred_check_branch
    %25 = sbr.rel (0) target = $region13
  $region12: #{gcn_forward.1} parent=0 // pred_region
    _
  $region13: #{gcn_forward.1} parent=0 // pred_fallthru
    _
  // Predicated region
  $region14: #{gcn_forward.1} parent=0 // pred_check
    _
  $region15: #{gcn_forward.1} parent=0 // pred_check_branch
    %27 = sbr.rel (0) target = $region17
  $region16: #{gcn_forward.1} parent=0 // pred_region
    _
  $region17: #{gcn_forward.1} parent=0 // pred_fallthru
    _
  // Predicated region
  $region18: #{gcn_forward.1} parent=0 // pred_check
    _
  $region19: #{gcn_forward.1} parent=0 // pred_check_branch
    %29 = sbr.rel (0) target = $region21
  $region20: #{gcn_forward.1} parent=0 // pred_region
    _
  $region21: #{gcn_forward.1} parent=0 // pred_fallthru
    _
  // Predicated region
  $region22: #{gcn_forward.1} parent=0 // pred_check
    _
  $region23: #{gcn_forward.1} parent=0 // pred_check_branch
    %31 = sbr.rel (0) target = $region25
  $region24: #{gcn_forward.1} parent=0 // pred_region
    _
  $region25: #{gcn_forward.1} parent=0 // pred_fallthru
    _
  // Predicated region
  $region26: #{gcn_forward.1} parent=0 // pred_check
    _
  $region27: #{gcn_forward.1} parent=0 // pred_check_branch
    %33 = sbr.rel (0) target = $region29
  $region28: #{gcn_forward.1} parent=0 // pred_region
    _
  $region29: #{gcn_forward.1} parent=0 // pred_fallthru
    _
  // Predicated region
  $region30: #{gcn_forward.1} parent=0 // pred_check
    _
  $region31: #{gcn_forward.1} parent=0 // pred_check_branch
    %35 = sbr.rel (0) target = $region33
  $region32: #{gcn_forward.1} parent=0 // pred_region
    _
  $region33: #{gcn_forward.1} parent=0 // pred_fallthru
    _
  // Predicated region
  $region34: #{gcn_forward.1} parent=0 // pred_check
    _
  $region35: #{gcn_forward.1} parent=0 // pred_check_branch
    %37 = sbr.rel (0) target = $region37
  $region36: #{gcn_forward.1} parent=0 // pred_region
    _
  $region37: #{gcn_forward.1} parent=0 // pred_fallthru
    _
  // Predicated region
  $region38: #{gcn_forward.1} parent=0 // pred_check
    _
  $region39: #{gcn_forward.1} parent=0 // pred_check_branch
    %39 = sbr.rel (0) target = $region41
  $region40: #{gcn_forward.1} parent=0 // pred_region
    _
  $region41: #{gcn_forward.1} parent=0 // pred_fallthru
    _
  // Predicated region
  $region42: #{gcn_forward.1} parent=0 // pred_check
    _
  $region43: #{gcn_forward.1} parent=0 // pred_check_branch
    %41 = sbr.rel (0) target = $region45
  $region44: #{gcn_forward.1} parent=0 // pred_region
    _
  $region45: #{gcn_forward.1} parent=0 // pred_fallthru
    _
  // Predicated region
  $region46: #{gcn_forward.1} parent=0 // pred_check
    _
  $region47: #{gcn_forward.1} parent=0 // pred_check_branch
    %43 = sbr.rel (0) target = $region49
  $region48: #{gcn_forward.1} parent=0 // pred_region
    _
  $region49: #{gcn_forward.1} parent=0 // pred_fallthru
    _
  // Predicated region
  $region50: #{gcn_forward.1} parent=0 // pred_check
    _
  $region51: #{gcn_forward.1} parent=0 // pred_check_branch
    %45 = sbr.rel (0) target = $region53
  $region52: #{gcn_forward.1} parent=0 // pred_region
    _
  $region53: #{gcn_forward.1} parent=0 // pred_fallthru
    _
  // Predicated region
  $region54: #{gcn_forward.1} parent=0 // pred_check
    _
  $region55: #{gcn_forward.1} parent=0 // pred_check_branch
    %47 = sbr.rel (0) target = $region57
  $region56: #{gcn_forward.1} parent=0 // pred_region
    _
  $region57: #{gcn_forward.1} parent=0 // pred_fallthru
    _
  // Predicated region
  $region58: #{gcn_forward.1} parent=0 // pred_check
    _
  $region59: #{gcn_forward.1} parent=0 // pred_check_branch
    %49 = sbr.rel (0) target = $region61
  $region60: #{gcn_forward.1} parent=0 // pred_region
    _
  $region61: #{gcn_forward.1} parent=0 // pred_fallthru
    _
  %v50 = vld [vmem:[%s0] sm:$0xff]
  %v51 = vld [vmem:[%s0 + $0x8] sm:$0xff]
  %v52 = vld [vmem:[%s0 + $0x10] sm:$0xff]
  %v53 = vld [vmem:[%s0 + $0x18] sm:$0xff]
  %v54 = vld [vmem:[%s0 + $0x20] sm:$0xff]
  %v55 = vld [vmem:[%s0 + $0x28] sm:$0xff]
  %v56 = vld [vmem:[%s1] sm:$0xff]
  %v57 = vld [vmem:[%s1 + $0x8] sm:$0xff]
  %v58 = vld [vmem:[%s1 + $0x10] sm:$0xff]
  %v59 = vld [vmem:[%s1 + $0x18] sm:$0xff]
  %v60 = vld [vmem:[%s1 + $0x20] sm:$0xff]
  %v61 = vld [vmem:[%s1 + $0x28] sm:$0xff]
  %v62 = vld [vmem:[%s1 + $0x30] sm:$0xff]
  %v63 = vld [vmem:[%s1 + $0x38] sm:$0xff]
  %v64 = vld [vmem:[%s1 + $0x40] sm:$0xff]
  %v65 = vld [vmem:[%s1 + $0x48] sm:$0xff]
  %v66 = vld [vmem:[%s1 + $0x50] sm:$0xff]
  %v67 = vld [vmem:[%s1 + $0x58] sm:$0xff]
  %v68 = vld [vmem:[%s1 + $0x60] sm:$0xff]
  %v69 = vld [vmem:[%s1 + $0x68] sm:$0xff]
  %v70 = vld [vmem:[%s1 + $0x70] sm:$0xff]
  %v71 = vld [vmem:[%s1 + $0x78] sm:$0xff]
  %72 = vmatprep.subr.mxu0 0.0
  %73 = vmatpush1.msra.mxu0 %v56
  %74 = vmatprep.subr.mxu0 0.0
  %75 = vmatpush1.msra.mxu0 %v57
  %76 = vmatprep.subr.mxu0 0.0
  %77 = vmatpush1.msra.mxu0 %v58
  %78 = vmatprep.subr.mxu0 0.0
  %79 = vmatpush1.msra.mxu0 %v59
  %80 = vmatprep.subr.mxu0 0.0
  %81 = vmatpush1.msra.mxu0 %v60
  %82 = vmatprep.subr.mxu0 0.0
  %83 = vmatpush1.msra.mxu0 %v61
  %84 = vmatprep.subr.mxu0 0.0
  %85 = vmatpush1.msra.mxu0 %v62
  %86 = vmatprep.subr.mxu0 0.0
  %87 = vmatpush1.msra.mxu0 %v63
  %88 = vmatprep.subr.mxu0 0.0
  %89 = vmatpush1.msra.mxu0 %v64
  %90 = vmatprep.subr.mxu0 0.0
  %91 = vmatpush1.msra.mxu0 %v65
  %92 = vmatprep.subr.mxu0 0.0
  %93 = vmatpush1.msra.mxu0 %v66
  %94 = vmatprep.subr.mxu0 0.0
  %95 = vmatpush1.msra.mxu0 %v67
  %96 = vmatprep.subr.mxu0 0.0
  %97 = vmatpush1.msra.mxu0 %v68
  %98 = vmatprep.subr.mxu0 0.0
  %99 = vmatpush1.msra.mxu0 %v69
  %100 = vmatprep.subr.mxu0 0.0
  %101 = vmatpush1.msra.mxu0 %v70
  %102 = vmatprep.subr.mxu0 0.0
  %103 = vmatpush1.msra.mxu0 %v71
  %104 = vmatprep.subr.mxu0 0.0
  %105 = vmatpush1.msra.mxu0 0.0
  %106 = vmatprep.subr.mxu0 0.0
  %107 = vmatpush1.msra.mxu0 0.0
  %108 = vmatprep.subr.mxu0 0.0
  %109 = vmatpush1.msra.mxu0 0.0
  %110 = vmatprep.subr.mxu0 0.0
  %111 = vmatpush1.msra.mxu0 0.0
  %112 = vmatprep.subr.mxu0 0.0
  %113 = vmatpush1.msra.mxu0 0.0
  %114 = vmatprep.subr.mxu0 0.0
  %115 = vmatpush1.msra.mxu0 0.0
  %116 = vmatprep.subr.mxu0 0.0
  %117 = vmatpush1.msra.mxu0 0.0
  %118 = vmatprep.subr.mxu0 0.0
  %119 = vmatpush1.msra.mxu0 0.0
  %120 = vmatprep.subr.mxu0 0.0
  %121 = vmatpush1.msra.mxu0 0.0
  %122 = vmatprep.subr.mxu0 0.0
  %123 = vmatpush1.msra.mxu0 0.0
  %124 = vmatprep.subr.mxu0 0.0
  %125 = vmatpush1.msra.mxu0 0.0
  %126 = vmatprep.subr.mxu0 0.0
  %127 = vmatpush1.msra.mxu0 0.0
  %128 = vmatprep.subr.mxu0 0.0
  %129 = vmatpush1.msra.mxu0 0.0
  %130 = vmatprep.subr.mxu0 0.0
  %131 = vmatpush1.msra.mxu0 0.0
  %132 = vmatprep.subr.mxu0 0.0
  %133 = vmatpush1.msra.mxu0 0.0
  %134 = vmatprep.subr.mxu0 0.0
  %135 = vmatpush1.msra.mxu0 0.0
  %136 = vmatprep.mubr.f32.mxu0 0.0
  %137 = vmatmul.mubr.f32.gmra.mrb[0].mxu0 %v50
  %v138 = vpop.f32.mrb[0].mxu0
  %v139 = vadd.f32 0.0, %v138
  %v140 = vpop.f32.mrb[0].mxu0
  %141 = vmatprep.mubr.f32.mxu0 0.0
  %142 = vmatmul.mubr.f32.gmra.mrb[0].mxu0 %v51
  %v143 = vpop.f32.mrb[0].mxu0
  %v144 = vadd.f32 0.0, %v143
  %v145 = vpop.f32.mrb[0].mxu0
  %146 = vmatprep.mubr.f32.mxu0 0.0
  %147 = vmatmul.mubr.f32.gmra.mrb[0].mxu0 %v52
  %v148 = vpop.f32.mrb[0].mxu0
  %v149 = vadd.f32 0.0, %v148
  %v150 = vpop.f32.mrb[0].mxu0
  %151 = vmatprep.mubr.f32.mxu0 0.0
  %152 = vmatmul.mubr.f32.gmra.mrb[0].mxu0 %v53
  %v153 = vpop.f32.mrb[0].mxu0
  %v154 = vadd.f32 0.0, %v153
  %v155 = vpop.f32.mrb[0].mxu0
  %156 = vmatprep.mubr.f32.mxu0 0.0
  %157 = vmatmul.mubr.f32.gmra.mrb[0].mxu0 %v54
  %v158 = vpop.f32.mrb[0].mxu0
  %v159 = vadd.f32 0.0, %v158
  %v160 = vpop.f32.mrb[0].mxu0
  %161 = vmatprep.mubr.f32.mxu0 0.0
  %162 = vmatmul.mubr.f32.gmra.mrb[0].mxu0 %v55
  %v163 = vpop.f32.mrb[0].mxu0
  %v164 = vadd.f32 0.0, %v163
  %v165 = vpop.f32.mrb[0].mxu0
  %166 = vdwg.mxu0
  %v167 = vld [vmem:[%s2] sm:$0xff]
  %v168 = vld [vmem:[%s2 + $0x8] sm:$0xff]
  %v169 = vld [vmem:[%s2 + $0x10] sm:$0xff]
  %v170 = vld [vmem:[%s2 + $0x18] sm:$0xff]
  %v171 = vld [vmem:[%s2 + $0x20] sm:$0xff]
  %v172 = vld [vmem:[%s2 + $0x28] sm:$0xff]
  %vm173 = vcmask 392192
  %v175 = vsel %vm173, %v167, 0
  %v178 = vsel %vm173, %v168, 0
  %v181 = vsel %vm173, %v169, 0
  %v184 = vsel %vm173, %v170, 0
  %v187 = vsel %vm173, %v171, 0
  %v190 = vsel %vm173, %v172, 0
  %192 = vmatprep.subr.mxu0 0.0
  %193 = vmatpush1.msra.mxu0 %v139
  %194 = vmatprep.subr.mxu0 0.0
  %195 = vmatpush1.msra.mxu0 %v144
  %196 = vmatprep.subr.mxu0 0.0
  %197 = vmatpush1.msra.mxu0 %v149
  %198 = vmatprep.subr.mxu0 0.0
  %199 = vmatpush1.msra.mxu0 %v154
  %200 = vmatprep.subr.mxu0 0.0
  %201 = vmatpush1.msra.mxu0 %v159
  %202 = vmatprep.subr.mxu0 0.0
  %203 = vmatpush1.msra.mxu0 %v164
  %204 = vmatprep.subr.mxu0 0.0
  %205 = vmatpush1.msra.mxu0 0.0
  %206 = vmatprep.subr.mxu0 0.0
  %207 = vmatpush1.msra.mxu0 0.0
  %208 = vmatprep.subr.mxu0 0.0
  %209 = vmatpush1.msra.mxu0 0.0
  %210 = vmatprep.subr.mxu0 0.0
  %211 = vmatpush1.msra.mxu0 0.0
  %212 = vmatprep.subr.mxu0 0.0
  %213 = vmatpush1.msra.mxu0 0.0
  %214 = vmatprep.subr.mxu0 0.0
  %215 = vmatpush1.msra.mxu0 0.0
  %216 = vmatprep.subr.mxu0 0.0
  %217 = vmatpush1.msra.mxu0 0.0
  %218 = vmatprep.subr.mxu0 0.0
  %219 = vmatpush1.msra.mxu0 0.0
  %220 = vmatprep.subr.mxu0 0.0
  %221 = vmatpush1.msra.mxu0 0.0
  %222 = vmatprep.subr.mxu0 0.0
  %223 = vmatpush1.msra.mxu0 0.0
  %224 = vmatprep.subr.mxu0 0.0
  %225 = vmatpush1.msra.mxu0 0.0
  %226 = vmatprep.subr.mxu0 0.0
  %227 = vmatpush1.msra.mxu0 0.0
  %228 = vmatprep.subr.mxu0 0.0
  %229 = vmatpush1.msra.mxu0 0.0
  %230 = vmatprep.subr.mxu0 0.0
  %231 = vmatpush1.msra.mxu0 0.0
  %232 = vmatprep.subr.mxu0 0.0
  %233 = vmatpush1.msra.mxu0 0.0
  %234 = vmatprep.subr.mxu0 0.0
  %235 = vmatpush1.msra.mxu0 0.0
  %236 = vmatprep.subr.mxu0 0.0
  %237 = vmatpush1.msra.mxu0 0.0
  %238 = vmatprep.subr.mxu0 0.0
  %239 = vmatpush1.msra.mxu0 0.0
  %240 = vmatprep.subr.mxu0 0.0
  %241 = vmatpush1.msra.mxu0 0.0
  %242 = vmatprep.subr.mxu0 0.0
  %243 = vmatpush1.msra.mxu0 0.0
  %244 = vmatprep.subr.mxu0 0.0
  %245 = vmatpush1.msra.mxu0 0.0
  %246 = vmatprep.subr.mxu0 0.0
  %247 = vmatpush1.msra.mxu0 0.0
  %248 = vmatprep.subr.mxu0 0.0
  %249 = vmatpush1.msra.mxu0 0.0
  %250 = vmatprep.subr.mxu0 0.0
  %251 = vmatpush1.msra.mxu0 0.0
  %252 = vmatprep.subr.mxu0 0.0
  %253 = vmatpush1.msra.mxu0 0.0
  %254 = vmatprep.subr.mxu0 0.0
  %255 = vmatpush1.msra.mxu0 0.0
  %256 = vmatprep.mubr.f32.mxu0 0.0
  %257 = vmatmul.mubr.f32.gmra.mrb[0].mxu0 %v175
  %v258 = vpop.f32.mrb[0].mxu0
  %v259 = vadd.f32 0.0, %v258
  %v260 = vpop.f32.mrb[0].mxu0
  %261 = vmatprep.mubr.f32.mxu0 0.0
  %262 = vmatmul.mubr.f32.gmra.mrb[0].mxu0 %v178
  %v263 = vpop.f32.mrb[0].mxu0
  %v264 = vadd.f32 0.0, %v263
  %v265 = vpop.f32.mrb[0].mxu0
  %266 = vmatprep.mubr.f32.mxu0 0.0
  %267 = vmatmul.mubr.f32.gmra.mrb[0].mxu0 %v181
  %v268 = vpop.f32.mrb[0].mxu0
  %v269 = vadd.f32 0.0, %v268
  %v270 = vpop.f32.mrb[0].mxu0
  %271 = vmatprep.mubr.f32.mxu0 0.0
  %272 = vmatmul.mubr.f32.gmra.mrb[0].mxu0 %v184
  %v273 = vpop.f32.mrb[0].mxu0
  %v274 = vadd.f32 0.0, %v273
  %v275 = vpop.f32.mrb[0].mxu0
  %276 = vmatprep.mubr.f32.mxu0 0.0
  %277 = vmatmul.mubr.f32.gmra.mrb[0].mxu0 %v187
  %v278 = vpop.f32.mrb[0].mxu0
  %v279 = vadd.f32 0.0, %v278
  %v280 = vpop.f32.mrb[0].mxu0
  %281 = vmatprep.mubr.f32.mxu0 0.0
  %282 = vmatmul.mubr.f32.gmra.mrb[0].mxu0 %v190
  %v283 = vpop.f32.mrb[0].mxu0
  %v284 = vadd.f32 0.0, %v283
  %v285 = vpop.f32.mrb[0].mxu0
  %286 = vdwg.mxu0
  %v287 = vld [vmem:[%s3] sm:$0xff]
  %v288 = vld [vmem:[%s3 + $0x8] sm:$0xff]
  %v289 = vld [vmem:[%s3 + $0x10] sm:$0xff]
  %v290 = vld [vmem:[%s3 + $0x18] sm:$0xff]
  %v291 = vld [vmem:[%s3 + $0x20] sm:$0xff]
  %v292 = vld [vmem:[%s3 + $0x28] sm:$0xff]
  %v293 = vmul.f32 %v259, %v287
  %v294 = vmul.f32 %v264, %v288
  %v295 = vmul.f32 %v269, %v289
  %v296 = vmul.f32 %v274, %v290
  %v297 = vmul.f32 %v279, %v291
  %v298 = vmul.f32 %v284, %v292
  %v299 = vld [vmem:[%s4] sm:$0xff]
  %v300 = vld [vmem:[%s4 + $0x8] sm:$0xff]
  %v301 = vld [vmem:[%s4 + $0x10] sm:$0xff]
  %v302 = vld [vmem:[%s4 + $0x18] sm:$0xff]
  %v303 = vld [vmem:[%s4 + $0x20] sm:$0xff]
  %v304 = vld [vmem:[%s4 + $0x28] sm:$0xff]
  %v305 = vadd.f32 %v293, %v299
  %v306 = vadd.f32 %v294, %v300
  %v307 = vadd.f32 %v295, %v301
  %v308 = vadd.f32 %v296, %v302
  %v309 = vadd.f32 %v297, %v303
  %v310 = vadd.f32 %v298, %v304
  %v311 = vtanh.pop %v305
  %v312 = vtanh.pop %v306
  %v313 = vtanh.pop %v307
  %v314 = vtanh.pop %v308
  %v315 = vtanh.pop %v309
  %v316 = vtanh.pop %v310
  %v317 = vld [vmem:[%s5] sm:$0xff]
  %v318 = vld [vmem:[%s5 + $0x8] sm:$0xff]
  %v319 = vld [vmem:[%s5 + $0x10] sm:$0xff]
  %v320 = vld [vmem:[%s5 + $0x18] sm:$0xff]
  %v321 = vld [vmem:[%s5 + $0x20] sm:$0xff]
  %v322 = vld [vmem:[%s5 + $0x28] sm:$0xff]
  %v323 = vld [vmem:[%s6] sm:$0xff]
  %v324 = vld [vmem:[%s6 + $0x8] sm:$0xff]
  %v325 = vld [vmem:[%s6 + $0x10] sm:$0xff]
  %v326 = vld [vmem:[%s6 + $0x18] sm:$0xff]
  %v327 = vld [vmem:[%s6 + $0x20] sm:$0xff]
  %v328 = vld [vmem:[%s6 + $0x28] sm:$0xff]
  %v329 = vld [vmem:[%s6 + $0x30] sm:$0xff]
  %v330 = vld [vmem:[%s6 + $0x38] sm:$0xff]
  %v331 = vld [vmem:[%s6 + $0x40] sm:$0xff]
  %v332 = vld [vmem:[%s6 + $0x48] sm:$0xff]
  %v333 = vld [vmem:[%s6 + $0x50] sm:$0xff]
  %v334 = vld [vmem:[%s6 + $0x58] sm:$0xff]
  %v335 = vld [vmem:[%s6 + $0x60] sm:$0xff]
  %v336 = vld [vmem:[%s6 + $0x68] sm:$0xff]
  %v337 = vld [vmem:[%s6 + $0x70] sm:$0xff]
  %v338 = vld [vmem:[%s6 + $0x78] sm:$0xff]
  %v339 = vld [vmem:[%s7] sm:$0xff]
  %v340 = vld [vmem:[%s7 + $0x8] sm:$0xff]
  %v341 = vld [vmem:[%s7 + $0x10] sm:$0xff]
  %v342 = vld [vmem:[%s7 + $0x18] sm:$0xff]
  %v343 = vld [vmem:[%s7 + $0x20] sm:$0xff]
  %v344 = vld [vmem:[%s7 + $0x28] sm:$0xff]
  %v345 = vld [vmem:[%s7 + $0x30] sm:$0xff]
  %v346 = vld [vmem:[%s7 + $0x38] sm:$0xff]
  %v347 = vld [vmem:[%s7 + $0x40] sm:$0xff]
  %v348 = vld [vmem:[%s7 + $0x48] sm:$0xff]
  %v349 = vld [vmem:[%s7 + $0x50] sm:$0xff]
  %v350 = vld [vmem:[%s7 + $0x58] sm:$0xff]
  %v351 = vld [vmem:[%s7 + $0x60] sm:$0xff]
  %v352 = vld [vmem:[%s7 + $0x68] sm:$0xff]
  %v353 = vld [vmem:[%s7 + $0x70] sm:$0xff]
  %v354 = vld [vmem:[%s7 + $0x78] sm:$0xff]
  %v355 = vmul.f32 %v311, 0.06226563
  %v356 = vmul.f32 %v312, 0.06226563
  %v357 = vmul.f32 %v313, 0.06226563
  %v358 = vmul.f32 %v314, 0.06226563
  %v359 = vmul.f32 %v315, 0.06226563
  %v360 = vmul.f32 %v316, 0.06226563
  %361 = vmatprep.subr.mxu0 0.0
  %362 = vmatpush1.msra.mxu0 %v339
  %363 = vmatprep.subr.mxu0 0.0
  %364 = vmatpush1.msra.mxu0 %v340
  %365 = vmatprep.subr.mxu0 0.0
  %366 = vmatpush1.msra.mxu0 %v341
  %367 = vmatprep.subr.mxu0 0.0
  %368 = vmatpush1.msra.mxu0 %v342
  %369 = vmatprep.subr.mxu0 0.0
  %370 = vmatpush1.msra.mxu0 %v343
  %371 = vmatprep.subr.mxu0 0.0
  %372 = vmatpush1.msra.mxu0 %v344
  %373 = vmatprep.subr.mxu0 0.0
  %374 = vmatpush1.msra.mxu0 %v345
  %375 = vmatprep.subr.mxu0 0.0
  %376 = vmatpush1.msra.mxu0 %v346
  %377 = vmatprep.subr.mxu0 0.0
  %378 = vmatpush1.msra.mxu0 %v347
  %379 = vmatprep.subr.mxu0 0.0
  %380 = vmatpush1.msra.mxu0 %v348
  %381 = vmatprep.subr.mxu0 0.0
  %382 = vmatpush1.msra.mxu0 %v349
  %383 = vmatprep.subr.mxu0 0.0
  %384 = vmatpush1.msra.mxu0 %v350
  %385 = vmatprep.subr.mxu0 0.0
  %386 = vmatpush1.msra.mxu0 %v351
  %387 = vmatprep.subr.mxu0 0.0
  %388 = vmatpush1.msra.mxu0 %v352
  %389 = vmatprep.subr.mxu0 0.0
  %390 = vmatpush1.msra.mxu0 %v353
  %391 = vmatprep.subr.mxu0 0.0
  %392 = vmatpush1.msra.mxu0 %v354
  %393 = vmatprep.subr.mxu0 0.0
  %394 = vmatpush1.msra.mxu0 0.0
  %395 = vmatprep.subr.mxu0 0.0
  %396 = vmatpush1.msra.mxu0 0.0
  %397 = vmatprep.subr.mxu0 0.0
  %398 = vmatpush1.msra.mxu0 0.0
  %399 = vmatprep.subr.mxu0 0.0
  %400 = vmatpush1.msra.mxu0 0.0
  %401 = vmatprep.subr.mxu0 0.0
  %402 = vmatpush1.msra.mxu0 0.0
  %403 = vmatprep.subr.mxu0 0.0
  %404 = vmatpush1.msra.mxu0 0.0
  %405 = vmatprep.subr.mxu0 0.0
  %406 = vmatpush1.msra.mxu0 0.0
  %407 = vmatprep.subr.mxu0 0.0
  %408 = vmatpush1.msra.mxu0 0.0
  %409 = vmatprep.subr.mxu0 0.0
  %410 = vmatpush1.msra.mxu0 0.0
  %411 = vmatprep.subr.mxu0 0.0
  %412 = vmatpush1.msra.mxu0 0.0
  %413 = vmatprep.subr.mxu0 0.0
  %414 = vmatpush1.msra.mxu0 0.0
  %415 = vmatprep.subr.mxu0 0.0
  %416 = vmatpush1.msra.mxu0 0.0
  %417 = vmatprep.subr.mxu0 0.0
  %418 = vmatpush1.msra.mxu0 0.0
  %419 = vmatprep.subr.mxu0 0.0
  %420 = vmatpush1.msra.mxu0 0.0
  %421 = vmatprep.subr.mxu0 0.0
  %422 = vmatpush1.msra.mxu0 0.0
  %423 = vmatprep.subr.mxu0 0.0
  %424 = vmatpush1.msra.mxu0 0.0
  %425 = vmatprep.mubr.f32.mxu0 0.0
  %426 = vmatmul.mubr.f32.gmra.mrb[0].mxu0 %v311
  %v427 = vpop.f32.mrb[0].mxu0
  %v428 = vadd.f32 %v355, %v427
  %v429 = vpop.f32.mrb[0].mxu0
  %430 = vmatprep.mubr.f32.mxu0 0.0
  %431 = vmatmul.mubr.f32.gmra.mrb[0].mxu0 %v312
  %v432 = vpop.f32.mrb[0].mxu0
  %v433 = vadd.f32 %v356, %v432
  %v434 = vpop.f32.mrb[0].mxu0
  %435 = vmatprep.mubr.f32.mxu0 0.0
  %436 = vmatmul.mubr.f32.gmra.mrb[0].mxu0 %v313
  %v437 = vpop.f32.mrb[0].mxu0
  %v438 = vadd.f32 %v357, %v437
  %v439 = vpop.f32.mrb[0].mxu0
  %440 = vmatprep.mubr.f32.mxu0 0.0
  %441 = vmatmul.mubr.f32.gmra.mrb[0].mxu0 %v314
  %v442 = vpop.f32.mrb[0].mxu0
  %v443 = vadd.f32 %v358, %v442
  %v444 = vpop.f32.mrb[0].mxu0
  %445 = vmatprep.mubr.f32.mxu0 0.0
  %446 = vmatmul.mubr.f32.gmra.mrb[0].mxu0 %v315
  %v447 = vpop.f32.mrb[0].mxu0
  %v448 = vadd.f32 %v359, %v447
  %v449 = vpop.f32.mrb[0].mxu0
  %450 = vmatprep.mubr.f32.mxu0 0.0
  %451 = vmatmul.mubr.f32.gmra.mrb[0].mxu0 %v316
  %v452 = vpop.f32.mrb[0].mxu0
  %v453 = vadd.f32 %v360, %v452
  %v454 = vpop.f32.mrb[0].mxu0
  %455 = vdwg.mxu0
  %v457 = vsel %vm173, %v317, 0
  %v460 = vsel %vm173, %v318, 0
  %v463 = vsel %vm173, %v319, 0
  %v466 = vsel %vm173, %v320, 0
  %v469 = vsel %vm173, %v321, 0
  %v472 = vsel %vm173, %v322, 0
  %474 = vmatprep.subr.mxu0 0.0
  %475 = vmatpush1.msra.mxu0 %v311
  %476 = vmatprep.subr.mxu0 0.0
  %477 = vmatpush1.msra.mxu0 %v312
  %478 = vmatprep.subr.mxu0 0.0
  %479 = vmatpush1.msra.mxu0 %v313
  %480 = vmatprep.subr.mxu0 0.0
  %481 = vmatpush1.msra.mxu0 %v314
  %482 = vmatprep.subr.mxu0 0.0
  %483 = vmatpush1.msra.mxu0 %v315
  %484 = vmatprep.subr.mxu0 0.0
  %485 = vmatpush1.msra.mxu0 %v316
  %486 = vmatprep.subr.mxu0 0.0
  %487 = vmatpush1.msra.mxu0 0.0
  %488 = vmatprep.subr.mxu0 0.0
  %489 = vmatpush1.msra.mxu0 0.0
  %490 = vmatprep.subr.mxu0 0.0
  %491 = vmatpush1.msra.mxu0 0.0
  %492 = vmatprep.subr.mxu0 0.0
  %493 = vmatpush1.msra.mxu0 0.0
  %494 = vmatprep.subr.mxu0 0.0
  %495 = vmatpush1.msra.mxu0 0.0
  %496 = vmatprep.subr.mxu0 0.0
  %497 = vmatpush1.msra.mxu0 0.0
  %498 = vmatprep.subr.mxu0 0.0
  %499 = vmatpush1.msra.mxu0 0.0
  %500 = vmatprep.subr.mxu0 0.0
  %501 = vmatpush1.msra.mxu0 0.0
  %502 = vmatprep.subr.mxu0 0.0
  %503 = vmatpush1.msra.mxu0 0.0
  %504 = vmatprep.subr.mxu0 0.0
  %505 = vmatpush1.msra.mxu0 0.0
  %506 = vmatprep.subr.mxu0 0.0
  %507 = vmatpush1.msra.mxu0 0.0
  %508 = vmatprep.subr.mxu0 0.0
  %509 = vmatpush1.msra.mxu0 0.0
  %510 = vmatprep.subr.mxu0 0.0
  %511 = vmatpush1.msra.mxu0 0.0
  %512 = vmatprep.subr.mxu0 0.0
  %513 = vmatpush1.msra.mxu0 0.0
  %514 = vmatprep.subr.mxu0 0.0
  %515 = vmatpush1.msra.mxu0 0.0
  %516 = vmatprep.subr.mxu0 0.0
  %517 = vmatpush1.msra.mxu0 0.0
  %518 = vmatprep.subr.mxu0 0.0
  %519 = vmatpush1.msra.mxu0 0.0
  %520 = vmatprep.subr.mxu0 0.0
  %521 = vmatpush1.msra.mxu0 0.0
  %522 = vmatprep.subr.mxu0 0.0
  %523 = vmatpush1.msra.mxu0 0.0
  %524 = vmatprep.subr.mxu0 0.0
  %525 = vmatpush1.msra.mxu0 0.0
  %526 = vmatprep.subr.mxu0 0.0
  %527 = vmatpush1.msra.mxu0 0.0
  %528 = vmatprep.subr.mxu0 0.0
  %529 = vmatpush1.msra.mxu0 0.0
  %530 = vmatprep.subr.mxu0 0.0
  %531 = vmatpush1.msra.mxu0 0.0
  %532 = vmatprep.subr.mxu0 0.0
  %533 = vmatpush1.msra.mxu0 0.0
  %534 = vmatprep.subr.mxu0 0.0
  %535 = vmatpush1.msra.mxu0 0.0
  %536 = vmatprep.subr.mxu0 0.0
  %537 = vmatpush1.msra.mxu0 0.0
  %538 = vmatprep.mubr.f32.mxu0 0.0
  %539 = vmatmul.mubr.f32.gmra.mrb[0].mxu0 %v457
  %v540 = vpop.f32.mrb[0].mxu0
  %v541 = vadd.f32 0.0, %v540
  %v542 = vpop.f32.mrb[0].mxu0
  %543 = vmatprep.mubr.f32.mxu0 0.0
  %544 = vmatmul.mubr.f32.gmra.mrb[0].mxu0 %v460
  %v545 = vpop.f32.mrb[0].mxu0
  %v546 = vadd.f32 0.0, %v545
  %v547 = vpop.f32.mrb[0].mxu0
  %548 = vmatprep.mubr.f32.mxu0 0.0
  %549 = vmatmul.mubr.f32.gmra.mrb[0].mxu0 %v463
  %v550 = vpop.f32.mrb[0].mxu0
  %v551 = vadd.f32 0.0, %v550
  %v552 = vpop.f32.mrb[0].mxu0
  %553 = vmatprep.mubr.f32.mxu0 0.0
  %554 = vmatmul.mubr.f32.gmra.mrb[0].mxu0 %v466
  %v555 = vpop.f32.mrb[0].mxu0
  %v556 = vadd.f32 0.0, %v555
  %v557 = vpop.f32.mrb[0].mxu0
  %558 = vmatprep.mubr.f32.mxu0 0.0
  %559 = vmatmul.mubr.f32.gmra.mrb[0].mxu0 %v469
  %v560 = vpop.f32.mrb[0].mxu0
  %v561 = vadd.f32 0.0, %v560
  %v562 = vpop.f32.mrb[0].mxu0
  %563 = vmatprep.mubr.f32.mxu0 0.0
  %564 = vmatmul.mubr.f32.gmra.mrb[0].mxu0 %v472
  %v565 = vpop.f32.mrb[0].mxu0
  %v566 = vadd.f32 0.0, %v565
  %v567 = vpop.f32.mrb[0].mxu0
  %568 = vdwg.mxu0
  %v569 = vmul.f32 %v541, 0.06226563
  %v570 = vmul.f32 %v546, 0.06226563
  %v571 = vmul.f32 %v551, 0.06226563
  %v572 = vmul.f32 %v556, 0.06226563
  %v573 = vmul.f32 %v561, 0.06226563
  %v574 = vmul.f32 %v566, 0.06226563
  %575 = vmatprep.subr.mxu0 0.0
  %576 = vmatpush1.msra.mxu0 %v323
  %577 = vmatprep.subr.mxu0 0.0
  %578 = vmatpush1.msra.mxu0 %v324
  %579 = vmatprep.subr.mxu0 0.0
  %580 = vmatpush1.msra.mxu0 %v325
  %581 = vmatprep.subr.mxu0 0.0
  %582 = vmatpush1.msra.mxu0 %v326
  %583 = vmatprep.subr.mxu0 0.0
  %584 = vmatpush1.msra.mxu0 %v327
  %585 = vmatprep.subr.mxu0 0.0
  %586 = vmatpush1.msra.mxu0 %v328
  %587 = vmatprep.subr.mxu0 0.0
  %588 = vmatpush1.msra.mxu0 %v329
  %589 = vmatprep.subr.mxu0 0.0
  %590 = vmatpush1.msra.mxu0 %v330
  %591 = vmatprep.subr.mxu0 0.0
  %592 = vmatpush1.msra.mxu0 %v331
  %593 = vmatprep.subr.mxu0 0.0
  %594 = vmatpush1.msra.mxu0 %v332
  %595 = vmatprep.subr.mxu0 0.0
  %596 = vmatpush1.msra.mxu0 %v333
  %597 = vmatprep.subr.mxu0 0.0
  %598 = vmatpush1.msra.mxu0 %v334
  %599 = vmatprep.subr.mxu0 0.0
  %600 = vmatpush1.msra.mxu0 %v335
  %601 = vmatprep.subr.mxu0 0.0
  %602 = vmatpush1.msra.mxu0 %v336
  %603 = vmatprep.subr.mxu0 0.0
  %604 = vmatpush1.msra.mxu0 %v337
  %605 = vmatprep.subr.mxu0 0.0
  %606 = vmatpush1.msra.mxu0 %v338
  %607 = vmatprep.subr.mxu0 0.0
  %608 = vmatpush1.msra.mxu0 0.0
  %609 = vmatprep.subr.mxu0 0.0
  %610 = vmatpush1.msra.mxu0 0.0
  %611 = vmatprep.subr.mxu0 0.0
  %612 = vmatpush1.msra.mxu0 0.0
  %613 = vmatprep.subr.mxu0 0.0
  %614 = vmatpush1.msra.mxu0 0.0
  %615 = vmatprep.subr.mxu0 0.0
  %616 = vmatpush1.msra.mxu0 0.0
  %617 = vmatprep.subr.mxu0 0.0
  %618 = vmatpush1.msra.mxu0 0.0
  %619 = vmatprep.subr.mxu0 0.0
  %620 = vmatpush1.msra.mxu0 0.0
  %621 = vmatprep.subr.mxu0 0.0
  %622 = vmatpush1.msra.mxu0 0.0
  %623 = vmatprep.subr.mxu0 0.0
  %624 = vmatpush1.msra.mxu0 0.0
  %625 = vmatprep.subr.mxu0 0.0
  %626 = vmatpush1.msra.mxu0 0.0
  %627 = vmatprep.subr.mxu0 0.0
  %628 = vmatpush1.msra.mxu0 0.0
  %629 = vmatprep.subr.mxu0 0.0
  %630 = vmatpush1.msra.mxu0 0.0
  %631 = vmatprep.subr.mxu0 0.0
  %632 = vmatpush1.msra.mxu0 0.0
  %633 = vmatprep.subr.mxu0 0.0
  %634 = vmatpush1.msra.mxu0 0.0
  %635 = vmatprep.subr.mxu0 0.0
  %636 = vmatpush1.msra.mxu0 0.0
  %637 = vmatprep.subr.mxu0 0.0
  %638 = vmatpush1.msra.mxu0 0.0
  %639 = vmatprep.mubr.f32.mxu0 0.0
  %640 = vmatmul.mubr.f32.gmra.mrb[0].mxu0 %v541
  %v641 = vpop.f32.mrb[0].mxu0
  %v642 = vadd.f32 %v569, %v641
  %v643 = vpop.f32.mrb[0].mxu0
  %644 = vmatprep.mubr.f32.mxu0 0.0
  %645 = vmatmul.mubr.f32.gmra.mrb[0].mxu0 %v546
  %v646 = vpop.f32.mrb[0].mxu0
  %v647 = vadd.f32 %v570, %v646
  %v648 = vpop.f32.mrb[0].mxu0
  %649 = vmatprep.mubr.f32.mxu0 0.0
  %650 = vmatmul.mubr.f32.gmra.mrb[0].mxu0 %v551
  %v651 = vpop.f32.mrb[0].mxu0
  %v652 = vadd.f32 %v571, %v651
  %v653 = vpop.f32.mrb[0].mxu0
  %654 = vmatprep.mubr.f32.mxu0 0.0
  %655 = vmatmul.mubr.f32.gmra.mrb[0].mxu0 %v556
  %v656 = vpop.f32.mrb[0].mxu0
  %v657 = vadd.f32 %v572, %v656
  %v658 = vpop.f32.mrb[0].mxu0
  %659 = vmatprep.mubr.f32.mxu0 0.0
  %660 = vmatmul.mubr.f32.gmra.mrb[0].mxu0 %v561
  %v661 = vpop.f32.mrb[0].mxu0
  %v662 = vadd.f32 %v573, %v661
  %v663 = vpop.f32.mrb[0].mxu0
  %664 = vmatprep.mubr.f32.mxu0 0.0
  %665 = vmatmul.mubr.f32.gmra.mrb[0].mxu0 %v566
  %v666 = vpop.f32.mrb[0].mxu0
  %v667 = vadd.f32 %v574, %v666
  %v668 = vpop.f32.mrb[0].mxu0
  %669 = vdwg.mxu0
  %v670 = vadd.f32 %v642, %v428
  %v671 = vadd.f32 %v647, %v433
  %v672 = vadd.f32 %v652, %v438
  %v673 = vadd.f32 %v657, %v443
  %v674 = vadd.f32 %v662, %v448
  %v675 = vadd.f32 %v667, %v453
  %v676 = vld [vmem:[%s8] sm:$0xff]
  %v677 = vld [vmem:[%s8 + $0x8] sm:$0xff]
  %v678 = vld [vmem:[%s8 + $0x10] sm:$0xff]
  %v679 = vld [vmem:[%s8 + $0x18] sm:$0xff]
  %v680 = vld [vmem:[%s8 + $0x20] sm:$0xff]
  %v681 = vld [vmem:[%s8 + $0x28] sm:$0xff]
  %v682 = vmul.f32 %v670, %v676
  %v683 = vmul.f32 %v671, %v677
  %v684 = vmul.f32 %v672, %v678
  %v685 = vmul.f32 %v673, %v679
  %v686 = vmul.f32 %v674, %v680
  %v687 = vmul.f32 %v675, %v681
  %v688 = vld [vmem:[%s9] sm:$0xff]
  %v689 = vld [vmem:[%s9 + $0x8] sm:$0xff]
  %v690 = vld [vmem:[%s9 + $0x10] sm:$0xff]
  %v691 = vld [vmem:[%s9 + $0x18] sm:$0xff]
  %v692 = vld [vmem:[%s9 + $0x20] sm:$0xff]
  %v693 = vld [vmem:[%s9 + $0x28] sm:$0xff]
  %v694 = vadd.f32 %v682, %v688
  %v695 = vadd.f32 %v683, %v689
  %v696 = vadd.f32 %v684, %v690
  %v697 = vadd.f32 %v685, %v691
  %v698 = vadd.f32 %v686, %v692
  %v699 = vadd.f32 %v687, %v693
  %v700 = vtanh.pop %v694
  %v701 = vtanh.pop %v695
  %v702 = vtanh.pop %v696
  %v703 = vtanh.pop %v697
  %v704 = vtanh.pop %v698
  %v705 = vtanh.pop %v699
  %706 = vmatprep.subr.mxu0 0.0
  %707 = vmatpush1.msra.mxu0 %v700
  %708 = vmatprep.subr.mxu0 0.0
  %709 = vmatpush1.msra.mxu0 %v701
  %710 = vmatprep.subr.mxu0 0.0
  %711 = vmatpush1.msra.mxu0 %v702
  %712 = vmatprep.subr.mxu0 0.0
  %713 = vmatpush1.msra.mxu0 %v703
  %714 = vmatprep.subr.mxu0 0.0
  %715 = vmatpush1.msra.mxu0 %v704
  %716 = vmatprep.subr.mxu0 0.0
  %717 = vmatpush1.msra.mxu0 %v705
  %718 = vmatprep.subr.mxu0 0.0
  %719 = vmatpush1.msra.mxu0 0.0
  %720 = vmatprep.subr.mxu0 0.0
  %721 = vmatpush1.msra.mxu0 0.0
  %722 = vmatprep.subr.mxu0 0.0
  %723 = vmatpush1.msra.mxu0 0.0
  %724 = vmatprep.subr.mxu0 0.0
  %725 = vmatpush1.msra.mxu0 0.0
  %726 = vmatprep.subr.mxu0 0.0
  %727 = vmatpush1.msra.mxu0 0.0
  %728 = vmatprep.subr.mxu0 0.0
  %729 = vmatpush1.msra.mxu0 0.0
  %730 = vmatprep.subr.mxu0 0.0
  %731 = vmatpush1.msra.mxu0 0.0
  %732 = vmatprep.subr.mxu0 0.0
  %733 = vmatpush1.msra.mxu0 0.0
  %734 = vmatprep.subr.mxu0 0.0
  %735 = vmatpush1.msra.mxu0 0.0
  %736 = vmatprep.subr.mxu0 0.0
  %737 = vmatpush1.msra.mxu0 0.0
  %738 = vmatprep.subr.mxu0 0.0
  %739 = vmatpush1.msra.mxu0 0.0
  %740 = vmatprep.subr.mxu0 0.0
  %741 = vmatpush1.msra.mxu0 0.0
  %742 = vmatprep.subr.mxu0 0.0
  %743 = vmatpush1.msra.mxu0 0.0
  %744 = vmatprep.subr.mxu0 0.0
  %745 = vmatpush1.msra.mxu0 0.0
  %746 = vmatprep.subr.mxu0 0.0
  %747 = vmatpush1.msra.mxu0 0.0
  %748 = vmatprep.subr.mxu0 0.0
  %749 = vmatpush1.msra.mxu0 0.0
  %750 = vmatprep.subr.mxu0 0.0
  %751 = vmatpush1.msra.mxu0 0.0
  %752 = vmatprep.subr.mxu0 0.0
  %753 = vmatpush1.msra.mxu0 0.0
  %754 = vmatprep.subr.mxu0 0.0
  %755 = vmatpush1.msra.mxu0 0.0
  %756 = vmatprep.subr.mxu0 0.0
  %757 = vmatpush1.msra.mxu0 0.0
  %758 = vmatprep.subr.mxu0 0.0
  %759 = vmatpush1.msra.mxu0 0.0
  %760 = vmatprep.subr.mxu0 0.0
  %761 = vmatpush1.msra.mxu0 0.0
  %762 = vmatprep.subr.mxu0 0.0
  %763 = vmatpush1.msra.mxu0 0.0
  %764 = vmatprep.subr.mxu0 0.0
  %765 = vmatpush1.msra.mxu0 0.0
  %766 = vmatprep.subr.mxu0 0.0
  %767 = vmatpush1.msra.mxu0 0.0
  %768 = vmatprep.subr.mxu0 0.0
  %769 = vmatpush1.msra.mxu0 0.0
  %770 = vmatprep.mubr.f32.mxu0 0.0
  %771 = vmatmul.mubr.f32.gmra.mrb[0].mxu0 %v457
  %v772 = vpop.f32.mrb[0].mxu0
  %v773 = vadd.f32 0.0, %v772
  %v774 = vpop.f32.mrb[0].mxu0
  %775 = vmatprep.mubr.f32.mxu0 0.0
  %776 = vmatmul.mubr.f32.gmra.mrb[0].mxu0 %v460
  %v777 = vpop.f32.mrb[0].mxu0
  %v778 = vadd.f32 0.0, %v777
  %v779 = vpop.f32.mrb[0].mxu0
  %780 = vmatprep.mubr.f32.mxu0 0.0
  %781 = vmatmul.mubr.f32.gmra.mrb[0].mxu0 %v463
  %v782 = vpop.f32.mrb[0].mxu0
  %v783 = vadd.f32 0.0, %v782
  %v784 = vpop.f32.mrb[0].mxu0
  %785 = vmatprep.mubr.f32.mxu0 0.0
  %786 = vmatmul.mubr.f32.gmra.mrb[0].mxu0 %v466
  %v787 = vpop.f32.mrb[0].mxu0
  %v788 = vadd.f32 0.0, %v787
  %v789 = vpop.f32.mrb[0].mxu0
  %790 = vmatprep.mubr.f32.mxu0 0.0
  %791 = vmatmul.mubr.f32.gmra.mrb[0].mxu0 %v469
  %v792 = vpop.f32.mrb[0].mxu0
  %v793 = vadd.f32 0.0, %v792
  %v794 = vpop.f32.mrb[0].mxu0
  %795 = vmatprep.mubr.f32.mxu0 0.0
  %796 = vmatmul.mubr.f32.gmra.mrb[0].mxu0 %v472
  %v797 = vpop.f32.mrb[0].mxu0
  %v798 = vadd.f32 0.0, %v797
  %v799 = vpop.f32.mrb[0].mxu0
  %800 = vdwg.mxu0
  %v801 = vmul.f32 %v773, 0.06226563
  %v802 = vmul.f32 %v778, 0.06226563
  %v803 = vmul.f32 %v783, 0.06226563
  %v804 = vmul.f32 %v788, 0.06226563
  %v805 = vmul.f32 %v793, 0.06226563
  %v806 = vmul.f32 %v798, 0.06226563
  %807 = vmatprep.subr.mxu0 0.0
  %808 = vmatpush1.msra.mxu0 %v323
  %809 = vmatprep.subr.mxu0 0.0
  %810 = vmatpush1.msra.mxu0 %v324
  %811 = vmatprep.subr.mxu0 0.0
  %812 = vmatpush1.msra.mxu0 %v325
  %813 = vmatprep.subr.mxu0 0.0
  %814 = vmatpush1.msra.mxu0 %v326
  %815 = vmatprep.subr.mxu0 0.0
  %816 = vmatpush1.msra.mxu0 %v327
  %817 = vmatprep.subr.mxu0 0.0
  %818 = vmatpush1.msra.mxu0 %v328
  %819 = vmatprep.subr.mxu0 0.0
  %820 = vmatpush1.msra.mxu0 %v329
  %821 = vmatprep.subr.mxu0 0.0
  %822 = vmatpush1.msra.mxu0 %v330
  %823 = vmatprep.subr.mxu0 0.0
  %824 = vmatpush1.msra.mxu0 %v331
  %825 = vmatprep.subr.mxu0 0.0
  %826 = vmatpush1.msra.mxu0 %v332
  %827 = vmatprep.subr.mxu0 0.0
  %828 = vmatpush1.msra.mxu0 %v333
  %829 = vmatprep.subr.mxu0 0.0
  %830 = vmatpush1.msra.mxu0 %v334
  %831 = vmatprep.subr.mxu0 0.0
  %832 = vmatpush1.msra.mxu0 %v335
  %833 = vmatprep.subr.mxu0 0.0
  %834 = vmatpush1.msra.mxu0 %v336
  %835 = vmatprep.subr.mxu0 0.0
  %836 = vmatpush1.msra.mxu0 %v337
  %837 = vmatprep.subr.mxu0 0.0
  %838 = vmatpush1.msra.mxu0 %v338
  %839 = vmatprep.subr.mxu0 0.0
  %840 = vmatpush1.msra.mxu0 0.0
  %841 = vmatprep.subr.mxu0 0.0
  %842 = vmatpush1.msra.mxu0 0.0
  %843 = vmatprep.subr.mxu0 0.0
  %844 = vmatpush1.msra.mxu0 0.0
  %845 = vmatprep.subr.mxu0 0.0
  %846 = vmatpush1.msra.mxu0 0.0
  %847 = vmatprep.subr.mxu0 0.0
  %848 = vmatpush1.msra.mxu0 0.0
  %849 = vmatprep.subr.mxu0 0.0
  %850 = vmatpush1.msra.mxu0 0.0
  %851 = vmatprep.subr.mxu0 0.0
  %852 = vmatpush1.msra.mxu0 0.0
  %853 = vmatprep.subr.mxu0 0.0
  %854 = vmatpush1.msra.mxu0 0.0
  %855 = vmatprep.subr.mxu0 0.0
  %856 = vmatpush1.msra.mxu0 0.0
  %857 = vmatprep.subr.mxu0 0.0
  %858 = vmatpush1.msra.mxu0 0.0
  %859 = vmatprep.subr.mxu0 0.0
  %860 = vmatpush1.msra.mxu0 0.0
  %861 = vmatprep.subr.mxu0 0.0
  %862 = vmatpush1.msra.mxu0 0.0
  %863 = vmatprep.subr.mxu0 0.0
  %864 = vmatpush1.msra.mxu0 0.0
  %865 = vmatprep.subr.mxu0 0.0
  %866 = vmatpush1.msra.mxu0 0.0
  %867 = vmatprep.subr.mxu0 0.0
  %868 = vmatpush1.msra.mxu0 0.0
  %869 = vmatprep.subr.mxu0 0.0
  %870 = vmatpush1.msra.mxu0 0.0
  %871 = vmatprep.mubr.f32.mxu0 0.0
  %872 = vmatmul.mubr.f32.gmra.mrb[0].mxu0 %v773
  %v873 = vpop.f32.mrb[0].mxu0
  %v874 = vadd.f32 %v801, %v873
  %v875 = vpop.f32.mrb[0].mxu0
  %876 = vmatprep.mubr.f32.mxu0 0.0
  %877 = vmatmul.mubr.f32.gmra.mrb[0].mxu0 %v778
  %v878 = vpop.f32.mrb[0].mxu0
  %v879 = vadd.f32 %v802, %v878
  %v880 = vpop.f32.mrb[0].mxu0
  %881 = vmatprep.mubr.f32.mxu0 0.0
  %882 = vmatmul.mubr.f32.gmra.mrb[0].mxu0 %v783
  %v883 = vpop.f32.mrb[0].mxu0
  %v884 = vadd.f32 %v803, %v883
  %v885 = vpop.f32.mrb[0].mxu0
  %886 = vmatprep.mubr.f32.mxu0 0.0
  %887 = vmatmul.mubr.f32.gmra.mrb[0].mxu0 %v788
  %v888 = vpop.f32.mrb[0].mxu0
  %v889 = vadd.f32 %v804, %v888
  %v890 = vpop.f32.mrb[0].mxu0
  %891 = vmatprep.mubr.f32.mxu0 0.0
  %892 = vmatmul.mubr.f32.gmra.mrb[0].mxu0 %v793
  %v893 = vpop.f32.mrb[0].mxu0
  %v894 = vadd.f32 %v805, %v893
  %v895 = vpop.f32.mrb[0].mxu0
  %896 = vmatprep.mubr.f32.mxu0 0.0
  %897 = vmatmul.mubr.f32.gmra.mrb[0].mxu0 %v798
  %v898 = vpop.f32.mrb[0].mxu0
  %v899 = vadd.f32 %v806, %v898
  %v900 = vpop.f32.mrb[0].mxu0
  %901 = vdwg.mxu0
  %v902 = vadd.f32 %v874, %v428
  %v903 = vadd.f32 %v879, %v433
  %v904 = vadd.f32 %v884, %v438
  %v905 = vadd.f32 %v889, %v443
  %v906 = vadd.f32 %v894, %v448
  %v907 = vadd.f32 %v899, %v453
  %v908 = vld [vmem:[%s10] sm:$0xff]
  %v909 = vld [vmem:[%s10 + $0x8] sm:$0xff]
  %v910 = vld [vmem:[%s10 + $0x10] sm:$0xff]
  %v911 = vld [vmem:[%s10 + $0x18] sm:$0xff]
  %v912 = vld [vmem:[%s10 + $0x20] sm:$0xff]
  %v913 = vld [vmem:[%s10 + $0x28] sm:$0xff]
  %v914 = vmul.f32 %v902, %v908
  %v915 = vmul.f32 %v903, %v909
  %v916 = vmul.f32 %v904, %v910
  %v917 = vmul.f32 %v905, %v911
  %v918 = vmul.f32 %v906, %v912
  %v919 = vmul.f32 %v907, %v913
  %v920 = vld [vmem:[%s11] sm:$0xff]
  %v921 = vld [vmem:[%s11 + $0x8] sm:$0xff]
  %v922 = vld [vmem:[%s11 + $0x10] sm:$0xff]
  %v923 = vld [vmem:[%s11 + $0x18] sm:$0xff]
  %v924 = vld [vmem:[%s11 + $0x20] sm:$0xff]
  %v925 = vld [vmem:[%s11 + $0x28] sm:$0xff]
  %v926 = vadd.f32 %v914, %v920
  %v927 = vadd.f32 %v915, %v921
  %v928 = vadd.f32 %v916, %v922
  %v929 = vadd.f32 %v917, %v923
  %v930 = vadd.f32 %v918, %v924
  %v931 = vadd.f32 %v919, %v925
  %v932 = vtanh.pop %v926
  %v933 = vtanh.pop %v927
  %v934 = vtanh.pop %v928
  %v935 = vtanh.pop %v929
  %v936 = vtanh.pop %v930
  %v937 = vtanh.pop %v931
  %v938 = vadd.f32 %v932, %v311
  %v939 = vadd.f32 %v933, %v312
  %v940 = vadd.f32 %v934, %v313
  %v941 = vadd.f32 %v935, %v314
  %v942 = vadd.f32 %v936, %v315
  %v943 = vadd.f32 %v937, %v316
  %v944 = vld [vmem:[%s12] sm:$0xff]
  %v945 = vld [vmem:[%s12 + $0x8] sm:$0xff]
  %v946 = vld [vmem:[%s12 + $0x10] sm:$0xff]
  %v947 = vld [vmem:[%s12 + $0x18] sm:$0xff]
  %v948 = vld [vmem:[%s12 + $0x20] sm:$0xff]
  %v949 = vld [vmem:[%s12 + $0x28] sm:$0xff]
  %v950 = vld [vmem:[%s12 + $0x30] sm:$0xff]
  %v951 = vld [vmem:[%s12 + $0x38] sm:$0xff]
  %v952 = vld [vmem:[%s12 + $0x40] sm:$0xff]
  %v953 = vld [vmem:[%s12 + $0x48] sm:$0xff]
  %v954 = vld [vmem:[%s12 + $0x50] sm:$0xff]
  %v955 = vld [vmem:[%s12 + $0x58] sm:$0xff]
  %v956 = vld [vmem:[%s12 + $0x60] sm:$0xff]
  %v957 = vld [vmem:[%s12 + $0x68] sm:$0xff]
  %v958 = vld [vmem:[%s12 + $0x70] sm:$0xff]
  %v959 = vld [vmem:[%s12 + $0x78] sm:$0xff]
  %960 = vmatprep.subr.mxu0 0.0
  %961 = vmatpush1.msra.mxu0 %v944
  %962 = vmatprep.subr.mxu0 0.0
  %963 = vmatpush1.msra.mxu0 %v945
  %964 = vmatprep.subr.mxu0 0.0
  %965 = vmatpush1.msra.mxu0 %v946
  %966 = vmatprep.subr.mxu0 0.0
  %967 = vmatpush1.msra.mxu0 %v947
  %968 = vmatprep.subr.mxu0 0.0
  %969 = vmatpush1.msra.mxu0 %v948
  %970 = vmatprep.subr.mxu0 0.0
  %971 = vmatpush1.msra.mxu0 %v949
  %972 = vmatprep.subr.mxu0 0.0
  %973 = vmatpush1.msra.mxu0 %v950
  %974 = vmatprep.subr.mxu0 0.0
  %975 = vmatpush1.msra.mxu0 %v951
  %976 = vmatprep.subr.mxu0 0.0
  %977 = vmatpush1.msra.mxu0 %v952
  %978 = vmatprep.subr.mxu0 0.0
  %979 = vmatpush1.msra.mxu0 %v953
  %980 = vmatprep.subr.mxu0 0.0
  %981 = vmatpush1.msra.mxu0 %v954
  %982 = vmatprep.subr.mxu0 0.0
  %983 = vmatpush1.msra.mxu0 %v955
  %984 = vmatprep.subr.mxu0 0.0
  %985 = vmatpush1.msra.mxu0 %v956
  %986 = vmatprep.subr.mxu0 0.0
  %987 = vmatpush1.msra.mxu0 %v957
  %988 = vmatprep.subr.mxu0 0.0
  %989 = vmatpush1.msra.mxu0 %v958
  %990 = vmatprep.subr.mxu0 0.0
  %991 = vmatpush1.msra.mxu0 %v959
  %992 = vmatprep.subr.mxu0 0.0
  %993 = vmatpush1.msra.mxu0 0.0
  %994 = vmatprep.subr.mxu0 0.0
  %995 = vmatpush1.msra.mxu0 0.0
  %996 = vmatprep.subr.mxu0 0.0
  %997 = vmatpush1.msra.mxu0 0.0
  %998 = vmatprep.subr.mxu0 0.0
  %999 = vmatpush1.msra.mxu0 0.0
  %1000 = vmatprep.subr.mxu0 0.0
  %1001 = vmatpush1.msra.mxu0 0.0
  %1002 = vmatprep.subr.mxu0 0.0
  %1003 = vmatpush1.msra.mxu0 0.0
  %1004 = vmatprep.subr.mxu0 0.0
  %1005 = vmatpush1.msra.mxu0 0.0
  %1006 = vmatprep.subr.mxu0 0.0
  %1007 = vmatpush1.msra.mxu0 0.0
  %1008 = vmatprep.subr.mxu0 0.0
  %1009 = vmatpush1.msra.mxu0 0.0
  %1010 = vmatprep.subr.mxu0 0.0
  %1011 = vmatpush1.msra.mxu0 0.0
  %1012 = vmatprep.subr.mxu0 0.0
  %1013 = vmatpush1.msra.mxu0 0.0
  %1014 = vmatprep.subr.mxu0 0.0
  %1015 = vmatpush1.msra.mxu0 0.0
  %1016 = vmatprep.subr.mxu0 0.0
  %1017 = vmatpush1.msra.mxu0 0.0
  %1018 = vmatprep.subr.mxu0 0.0
  %1019 = vmatpush1.msra.mxu0 0.0
  %1020 = vmatprep.subr.mxu0 0.0
  %1021 = vmatpush1.msra.mxu0 0.0
  %1022 = vmatprep.subr.mxu0 0.0
  %1023 = vmatpush1.msra.mxu0 0.0
  %1024 = vmatprep.mubr.f32.mxu0 0.0
  %1025 = vmatmul.mubr.f32.gmra.mrb[0].mxu0 %v938
  %v1026 = vpop.f32.mrb[0].mxu0
  %v1027 = vadd.f32 0.0, %v1026
  %v1028 = vpop.f32.mrb[0].mxu0
  %1029 = vmatprep.mubr.f32.mxu0 0.0
  %1030 = vmatmul.mubr.f32.gmra.mrb[0].mxu0 %v939
  %v1031 = vpop.f32.mrb[0].mxu0
  %v1032 = vadd.f32 0.0, %v1031
  %v1033 = vpop.f32.mrb[0].mxu0
  %1034 = vmatprep.mubr.f32.mxu0 0.0
  %1035 = vmatmul.mubr.f32.gmra.mrb[0].mxu0 %v940
  %v1036 = vpop.f32.mrb[0].mxu0
  %v1037 = vadd.f32 0.0, %v1036
  %v1038 = vpop.f32.mrb[0].mxu0
  %1039 = vmatprep.mubr.f32.mxu0 0.0
  %1040 = vmatmul.mubr.f32.gmra.mrb[0].mxu0 %v941
  %v1041 = vpop.f32.mrb[0].mxu0
  %v1042 = vadd.f32 0.0, %v1041
  %v1043 = vpop.f32.mrb[0].mxu0
  %1044 = vmatprep.mubr.f32.mxu0 0.0
  %1045 = vmatmul.mubr.f32.gmra.mrb[0].mxu0 %v942
  %v1046 = vpop.f32.mrb[0].mxu0
  %v1047 = vadd.f32 0.0, %v1046
  %v1048 = vpop.f32.mrb[0].mxu0
  %1049 = vmatprep.mubr.f32.mxu0 0.0
  %1050 = vmatmul.mubr.f32.gmra.mrb[0].mxu0 %v943
  %v1051 = vpop.f32.mrb[0].mxu0
  %v1052 = vadd.f32 0.0, %v1051
  %v1053 = vpop.f32.mrb[0].mxu0
  %1054 = vdwg.mxu0
  %v1055 = vld [vmem:[%s13] sm:$0xff]
  %v1056 = vld [vmem:[%s13 + $0x8] sm:$0xff]
  %v1057 = vld [vmem:[%s13 + $0x10] sm:$0xff]
  %v1058 = vld [vmem:[%s13 + $0x18] sm:$0xff]
  %v1059 = vld [vmem:[%s13 + $0x20] sm:$0xff]
  %v1060 = vld [vmem:[%s13 + $0x28] sm:$0xff]
  %v1061 = vld [vmem:[%s14] sm:$0x1]
  %v1063 = vlaneseq
  %v1064 = vshrl.u32 %v1063, 7
  %v1065 = vsub.s32 0, %v1064
  %v1066 = vrot.slane %v1061, %v1065
  %v1069 = vsel %vm173, %v1055, 0
  %v1072 = vsel %vm173, %v1056, 0
  %v1075 = vsel %vm173, %v1057, 0
  %v1078 = vsel %vm173, %v1058, 0
  %v1081 = vsel %vm173, %v1059, 0
  %v1084 = vsel %vm173, %v1060, 0
  %1086 = vmatprep.subr.mxu0 0.0
  %1087 = vmatpush1.msra.mxu0 %v1027
  %1088 = vmatprep.subr.mxu0 0.0
  %1089 = vmatpush1.msra.mxu0 %v1032
  %1090 = vmatprep.subr.mxu0 0.0
  %1091 = vmatpush1.msra.mxu0 %v1037
  %1092 = vmatprep.subr.mxu0 0.0
  %1093 = vmatpush1.msra.mxu0 %v1042
  %1094 = vmatprep.subr.mxu0 0.0
  %1095 = vmatpush1.msra.mxu0 %v1047
  %1096 = vmatprep.subr.mxu0 0.0
  %1097 = vmatpush1.msra.mxu0 %v1052
  %1098 = vmatprep.subr.mxu0 0.0
  %1099 = vmatpush1.msra.mxu0 0.0
  %1100 = vmatprep.subr.mxu0 0.0
  %1101 = vmatpush1.msra.mxu0 0.0
  %1102 = vmatprep.subr.mxu0 0.0
  %1103 = vmatpush1.msra.mxu0 0.0
  %1104 = vmatprep.subr.mxu0 0.0
  %1105 = vmatpush1.msra.mxu0 0.0
  %1106 = vmatprep.subr.mxu0 0.0
  %1107 = vmatpush1.msra.mxu0 0.0
  %1108 = vmatprep.subr.mxu0 0.0
  %1109 = vmatpush1.msra.mxu0 0.0
  %1110 = vmatprep.subr.mxu0 0.0
  %1111 = vmatpush1.msra.mxu0 0.0
  %1112 = vmatprep.subr.mxu0 0.0
  %1113 = vmatpush1.msra.mxu0 0.0
  %1114 = vmatprep.subr.mxu0 0.0
  %1115 = vmatpush1.msra.mxu0 0.0
  %1116 = vmatprep.subr.mxu0 0.0
  %1117 = vmatpush1.msra.mxu0 0.0
  %1118 = vmatprep.subr.mxu0 0.0
  %1119 = vmatpush1.msra.mxu0 0.0
  %1120 = vmatprep.subr.mxu0 0.0
  %1121 = vmatpush1.msra.mxu0 0.0
  %1122 = vmatprep.subr.mxu0 0.0
  %1123 = vmatpush1.msra.mxu0 0.0
  %1124 = vmatprep.subr.mxu0 0.0
  %1125 = vmatpush1.msra.mxu0 0.0
  %1126 = vmatprep.subr.mxu0 0.0
  %1127 = vmatpush1.msra.mxu0 0.0
  %1128 = vmatprep.subr.mxu0 0.0
  %1129 = vmatpush1.msra.mxu0 0.0
  %1130 = vmatprep.subr.mxu0 0.0
  %1131 = vmatpush1.msra.mxu0 0.0
  %1132 = vmatprep.subr.mxu0 0.0
  %1133 = vmatpush1.msra.mxu0 0.0
  %1134 = vmatprep.subr.mxu0 0.0
  %1135 = vmatpush1.msra.mxu0 0.0
  %1136 = vmatprep.subr.mxu0 0.0
  %1137 = vmatpush1.msra.mxu0 0.0
  %1138 = vmatprep.subr.mxu0 0.0
  %1139 = vmatpush1.msra.mxu0 0.0
  %1140 = vmatprep.subr.mxu0 0.0
  %1141 = vmatpush1.msra.mxu0 0.0
  %1142 = vmatprep.subr.mxu0 0.0
  %1143 = vmatpush1.msra.mxu0 0.0
  %1144 = vmatprep.subr.mxu0 0.0
  %1145 = vmatpush1.msra.mxu0 0.0
  %1146 = vmatprep.subr.mxu0 0.0
  %1147 = vmatpush1.msra.mxu0 0.0
  %1148 = vmatprep.subr.mxu0 0.0
  %1149 = vmatpush1.msra.mxu0 0.0
  %1150 = vmatprep.mubr.f32.mxu0 0.0
  %1151 = vmatmul.mubr.f32.gmra.mrb[0].mxu0 %v1069
  %v1152 = vpop.f32.mrb[0].mxu0
  %v1153 = vadd.f32 %v1066, %v1152
  %v1154 = vpop.f32.mrb[0].mxu0
  %1155 = vmatprep.mubr.f32.mxu0 0.0
  %1156 = vmatmul.mubr.f32.gmra.mrb[0].mxu0 %v1072
  %v1157 = vpop.f32.mrb[0].mxu0
  %v1158 = vadd.f32 %v1066, %v1157
  %v1159 = vpop.f32.mrb[0].mxu0
  %1160 = vmatprep.mubr.f32.mxu0 0.0
  %1161 = vmatmul.mubr.f32.gmra.mrb[0].mxu0 %v1075
  %v1162 = vpop.f32.mrb[0].mxu0
  %v1163 = vadd.f32 %v1066, %v1162
  %v1164 = vpop.f32.mrb[0].mxu0
  %1165 = vmatprep.mubr.f32.mxu0 0.0
  %1166 = vmatmul.mubr.f32.gmra.mrb[0].mxu0 %v1078
  %v1167 = vpop.f32.mrb[0].mxu0
  %v1168 = vadd.f32 %v1066, %v1167
  %v1169 = vpop.f32.mrb[0].mxu0
  %1170 = vmatprep.mubr.f32.mxu0 0.0
  %1171 = vmatmul.mubr.f32.gmra.mrb[0].mxu0 %v1081
  %v1172 = vpop.f32.mrb[0].mxu0
  %v1173 = vadd.f32 %v1066, %v1172
  %v1174 = vpop.f32.mrb[0].mxu0
  %1175 = vmatprep.mubr.f32.mxu0 0.0
  %1176 = vmatmul.mubr.f32.gmra.mrb[0].mxu0 %v1084
  %v1177 = vpop.f32.mrb[0].mxu0
  %v1178 = vadd.f32 %v1066, %v1177
  %v1179 = vpop.f32.mrb[0].mxu0
  %1180 = vdwg.mxu0
  %v1181 = vadd.f32 %v1153, %v50
  %v1182 = vadd.f32 %v1158, %v51
  %v1183 = vadd.f32 %v1163, %v52
  %v1184 = vadd.f32 %v1168, %v53
  %v1185 = vadd.f32 %v1173, %v54
  %v1186 = vadd.f32 %v1178, %v55
  %1187 = vst [vmem:[%s15] sm:$0xff] %v1181
  %1188 = vst [vmem:[%s15 + $0x8] sm:$0xff] %v1182
  %1189 = vst [vmem:[%s15 + $0x10] sm:$0xff] %v1183
  %1190 = vst [vmem:[%s15 + $0x18] sm:$0xff] %v1184
  %1191 = vst [vmem:[%s15 + $0x20] sm:$0xff] %v1185
  %1192 = vst [vmem:[%s15 + $0x28] sm:$0xff] %v1186
  // Predicated region
  $region62: #{gcn_forward.1} parent=0 // pred_check
    _
  $region63: #{gcn_forward.1} parent=0 // pred_check_branch
    %1194 = sbr.rel (0) target = $region65
  $region64: #{gcn_forward.1} parent=0 // pred_region
    _
  $region65: #{gcn_forward.1} parent=0 // pred_fallthru
    _
  // Predicated region
  $region66: #{gcn_forward.1} parent=0 // pred_check
    _
  $region67: #{gcn_forward.1} parent=0 // pred_check_branch
    %1196 = sbr.rel (0) target = $region69
  $region68: #{gcn_forward.1} parent=0 // pred_region
    _
  $region69: #{gcn_forward.1} parent=0 // pred_fallthru
    _

</llo_original>
